<compile_context>
chip_gen: v7x
topology: tpu7x:2x2x1
jax: 0.10.0
libtpu: 0.0.40
codegen_flags: <defaults>
</compile_context>

<pallas_src>
import jax
import jax.numpy as jnp
from jax import lax
from jax.experimental import pallas as pl
from jax.experimental.pallas import tpu as pltpu

LN_EPS = 1e-5
_MM_PREC = lax.Precision.HIGHEST  # full-f32 MXU passes; kernel is mem-bound so this is free


def mlp_kernel(x_ref, w1_ref, b1_ref, g_ref, beta_ref,
               w2_ref, b2_ref, w3_ref, b3_ref, out_ref):
    # Everything f32: x_ref (TB, D_in), weights (in, out), biases / LN params (1, feat).
    x = x_ref[...]

    # Linear(input -> hidden) + ReLU
    h = jnp.dot(x, w1_ref[...], preferred_element_type=jnp.float32, precision=_MM_PREC)
    h = jnp.maximum(h + b1_ref[...], 0.0)

    # LayerNorm over the feature dim (biased variance, eps=1e-5, affine)
    mu = jnp.mean(h, axis=-1, keepdims=True)
    var = jnp.mean((h - mu) ** 2, axis=-1, keepdims=True)
    h = (h - mu) * lax.rsqrt(var + LN_EPS) * g_ref[...] + beta_ref[...]

    # Linear(hidden -> hidden) + Tanh
    h = jnp.dot(h, w2_ref[...], preferred_element_type=jnp.float32, precision=_MM_PREC)
    h = jnp.tanh(h + b2_ref[...])

    # Final Linear(hidden -> num_classes). Output block's last dim equals the full array
    # dim (no 128-lane padding) so HBM writeback is only num_classes columns per row.
    out_ref[...] = (jnp.dot(h, w3_ref[...], preferred_element_type=jnp.float32,
                            precision=_MM_PREC)
                    + b3_ref[...]).astype(out_ref.dtype)


def _round_up(n, m):
    return ((n + m - 1) // m) * m


def _batch_tile(batch, block_rows, min_steps=2):
    """Largest legal batch tile: multiple-of-8 rows (or == B), but with >= min_steps grid
    steps on big batches so v7x's two TensorCores each get work."""
    if batch <= block_rows:
        tb = batch
        if batch >= 16 * min_steps:
            tb = 8 * ((-(-batch // min_steps) + 7) // 8)   # ceil(B/min_steps) -> mult of 8
        return tb
    return max(8, (block_rows // 8) * 8)


def fully_connected_forward(x, params, *, block_rows=4096):
    """x: (B, C, H, W) or (B, input_size). Flattens like torch's x.view(B, -1)."""
    batch = x.shape[0]
    x2d = x.reshape(batch, -1)          # f32, no wrapper-side cast (cast-free HBM path)
    d_in = x2d.shape[1]

    (w1, b1, g, beta, w2, b2, w3, b3) = params
    hidden = w1.shape[1]
    num_classes = w3.shape[1]
    param_list = (w1, b1, g, beta, w2, b2, w3, b3)

    tb = _batch_tile(batch, block_rows)
    num_steps = -(-batch // tb)
    grid = (num_steps,)

    row_map = lambda i: (i, 0)       # batch-tiled arrays (x, out)
    const_map = lambda i: (0, 0)     # VMEM-resident params (same block every grid step)
    resident = lambda a: pl.BlockSpec(a.shape, const_map)

    # Triple-buffer the input stream on long grids (hides HBM latency, mainly on v5e).
    x_buffers = 3 if num_steps >= 4 else 2
    x_kwargs = {"pipeline_mode": pl.Buffered(3)} if x_buffers == 3 else {}
    x_spec = pl.BlockSpec((tb, d_in), row_map, **x_kwargs)

    # VMEM budget: buffered x + double-buffered out tiles (lane/sublane padded) + params,
    # plus headroom; floor at 16 MiB, ceiling safely under v7x's 64 MiB physical VMEM.
    def padded_bytes(rows, cols, itemsize=4):
        return _round_up(max(rows, 1), 8) * _round_up(max(cols, 1), 128) * itemsize

    vmem_bytes = (x_buffers * padded_bytes(tb, d_in)
                  + 2 * padded_bytes(tb, num_classes)
                  + sum(padded_bytes(*p.shape) for p in param_list)
                  + (2 << 20))
    vmem_bytes = int(min(max(vmem_bytes, 16 << 20), 56 << 20))

    cost = pl.CostEstimate(
        flops=2 * batch * (d_in * hidden + hidden * hidden + hidden * num_classes),
        transcendentals=batch * (hidden + 1),           # tanh per hidden elem + rsqrt per row
        bytes_accessed=4 * (batch * (d_in + num_classes)
                            + sum(int(p.size) for p in param_list)),
    )

    return pl.pallas_call(
        mlp_kernel,
        out_shape=jax.ShapeDtypeStruct((batch, num_classes), jnp.float32),
        grid=grid,
        in_specs=[
            x_spec,
            resident(w1), resident(b1), resident(g), resident(beta),
            resident(w2), resident(b2), resident(w3), resident(b3),
        ],
        out_specs=pl.BlockSpec((tb, num_classes), row_map),
        compiler_params=pltpu.CompilerParams(
            dimension_semantics=("parallel",),   # batch tiles are independent rows
            vmem_limit_bytes=vmem_bytes,
        ),
        cost_estimate=cost,
    )(x2d, w1, b1, g, beta, w2, b2, w3, b3)


def init_params(key, input_size, hidden, num_classes):
    """PyTorch-style uniform(-1/sqrt(fan_in), 1/sqrt(fan_in)) init, deterministic."""
    ks = jax.random.split(key, 6)

    def linear(kw, kb, fan_in, fan_out):
        bound = 1.0 / (fan_in ** 0.5)
        # stored as (in, out): transpose of torch's (out, in) weight
        w = jax.random.uniform(kw, (fan_in, fan_out), jnp.float32, -bound, bound)
        b = jax.random.uniform(kb, (1, fan_out), jnp.float32, -bound, bound)
        return w, b

    w1, b1 = linear(ks[0], ks[1], input_size, hidden)
    w2, b2 = linear(ks[2], ks[3], hidden, hidden)
    w3, b3 = linear(ks[4], ks[5], hidden, num_classes)
    g = jnp.ones((1, hidden), jnp.float32)      # LayerNorm gamma
    beta = jnp.zeros((1, hidden), jnp.float32)  # LayerNorm beta
    return (w1, b1, g, beta, w2, b2, w3, b3)


def reference_forward(x, params):
    """Pure-JAX f32 reference mirroring the module semantics (same HIGHEST-precision
    matmuls as the kernel, so tolerances stay tight and match a torch f32 module)."""
    (w1, b1, g, beta, w2, b2, w3, b3) = params
    h = x.reshape(x.shape[0], -1)
    h = jnp.maximum(jnp.dot(h, w1, precision=_MM_PREC) + b1, 0.0)
    mu = jnp.mean(h, axis=-1, keepdims=True)
    var = jnp.mean((h - mu) ** 2, axis=-1, keepdims=True)
    h = (h - mu) * lax.rsqrt(var + LN_EPS) * g + beta
    h = jnp.tanh(jnp.dot(h, w2, precision=_MM_PREC) + b2)
    return jnp.dot(h, w3, precision=_MM_PREC) + b3


if __name__ == "__main__":
    key = jax.random.PRNGKey(0)
    k_x, k_p, k_x2 = jax.random.split(key, 3)

    # x in NCHW, flattened inside the wrapper exactly like torch's x.view(B, -1)
    B, C, H, W = 2, 4, 4, 4
    input_size = C * H * W          # 64 (module default)
    hidden = 32
    num_classes = 10

    params = init_params(k_p, input_size, hidden, num_classes)

    # Small-shape check (module-default config, batch=2 -> single grid step).
    x = jax.random.normal(k_x, (B, C, H, W), jnp.float32)
    out = jax.block_until_ready(fully_connected_forward(x, params))
    ref = reference_forward(x, params)
    assert out.shape == (B, num_classes)
    assert jnp.allclose(out, ref, atol=1e-4, rtol=1e-4), "mismatch vs reference (B=2)"

    # Larger batch exercises the multi-step 'parallel' grid (tile split so both v7x
    # TensorCores get work) and the partial-tile-free tiled path.
    B_large = 1024
    x_large = jax.random.normal(k_x2, (B_large, C, H, W), jnp.float32)
    out_large = jax.block_until_ready(fully_connected_forward(x_large, params))
    ref_large = reference_forward(x_large, params)
    assert out_large.shape == (B_large, num_classes)
    assert jnp.allclose(out_large, ref_large, atol=1e-4, rtol=1e-4), \
        "mismatch vs reference (B=1024)"

    print("KERNEL_OK")
</pallas_src>

<mosaic_0001>
module attributes {stable_mosaic.version = 11 : i64} {
  func.func @mlp_kernel(%arg0: i32, %arg1: memref<2x64xf32, #tpu.memory_space<vmem>>, %arg2: memref<64x32xf32, #tpu.memory_space<vmem>>, %arg3: memref<1x32xf32, #tpu.memory_space<vmem>>, %arg4: memref<1x32xf32, #tpu.memory_space<vmem>>, %arg5: memref<1x32xf32, #tpu.memory_space<vmem>>, %arg6: memref<32x32xf32, #tpu.memory_space<vmem>>, %arg7: memref<1x32xf32, #tpu.memory_space<vmem>>, %arg8: memref<32x10xf32, #tpu.memory_space<vmem>>, %arg9: memref<1x10xf32, #tpu.memory_space<vmem>>, %arg10: memref<2x10xf32, #tpu.memory_space<vmem>>) attributes {dimension_semantics = [#tpu.dimension_semantics<parallel>], iteration_bounds = array<i64: 1>, scalar_prefetch = 0 : i64, scratch_operands = 0 : i64, tpu.core_type = #tpu.core_type<tc>, window_params = [{transform_indices = @transform_0, window_bounds = array<i64: 2, 64>}, {pipeline_mode = #tpu.pipeline_mode<synchronous>, transform_indices = @transform_1, window_bounds = array<i64: 64, 32>}, {pipeline_mode = #tpu.pipeline_mode<synchronous>, transform_indices = @transform_2, window_bounds = array<i64: 1, 32>}, {pipeline_mode = #tpu.pipeline_mode<synchronous>, transform_indices = @transform_3, window_bounds = array<i64: 1, 32>}, {pipeline_mode = #tpu.pipeline_mode<synchronous>, transform_indices = @transform_4, window_bounds = array<i64: 1, 32>}, {pipeline_mode = #tpu.pipeline_mode<synchronous>, transform_indices = @transform_5, window_bounds = array<i64: 32, 32>}, {pipeline_mode = #tpu.pipeline_mode<synchronous>, transform_indices = @transform_6, window_bounds = array<i64: 1, 32>}, {pipeline_mode = #tpu.pipeline_mode<synchronous>, transform_indices = @transform_7, window_bounds = array<i64: 32, 10>}, {pipeline_mode = #tpu.pipeline_mode<synchronous>, transform_indices = @transform_8, window_bounds = array<i64: 1, 10>}, {transform_indices = @transform_9, window_bounds = array<i64: 2, 10>}]} {
    %c0 = arith.constant 0 : index
    %c0_0 = arith.constant 0 : index
    %0 = vector.load %arg1[%c0, %c0_0] : memref<2x64xf32, #tpu.memory_space<vmem>>, vector<2x64xf32>
    %c0_1 = arith.constant 0 : index
    %c0_2 = arith.constant 0 : index
    %1 = vector.load %arg2[%c0_1, %c0_2] : memref<64x32xf32, #tpu.memory_space<vmem>>, vector<64x32xf32>
    %cst = arith.constant dense<0.000000e+00> : vector<2x32xf32>
    %2 = tpu.matmul %0, %1, %cst {dimension_numbers = #tpu.dot_dimension_numbers<[1], [0], [0], [1], [0, 0, 1, 1], [], []>, precision = #tpu.contract_precision<fp32>} : vector<2x64xf32>, vector<64x32xf32>, vector<2x32xf32> -> vector<2x32xf32>
    %c0_3 = arith.constant 0 : index
    %c0_4 = arith.constant 0 : index
    %3 = vector.load %arg3[%c0_3, %c0_4] : memref<1x32xf32, #tpu.memory_space<vmem>>, vector<1x32xf32>
    %4 = vector.broadcast %3 : vector<1x32xf32> to vector<2x32xf32>
    %5 = arith.addf %2, %4 : vector<2x32xf32>
    %cst_5 = arith.constant 0.000000e+00 : f32
    %6 = vector.broadcast %cst_5 : f32 to vector<2x32xf32>
    %7 = arith.maximumf %5, %6 : vector<2x32xf32>
    %cst_6 = arith.constant dense<0.000000e+00> : vector<2xf32>
    %8 = vector.multi_reduction <add>, %7, %cst_6 [1] : vector<2x32xf32> to vector<2xf32>
    %9 = vector.shape_cast %8 : vector<2xf32> to vector<2x1xf32>
    %cst_7 = arith.constant 3.200000e+01 : f32
    %10 = vector.broadcast %cst_7 : f32 to vector<2x1xf32>
    %11 = arith.divf %9, %10 : vector<2x1xf32>
    %12 = vector.broadcast %11 : vector<2x1xf32> to vector<2x32xf32>
    %13 = arith.subf %7, %12 : vector<2x32xf32>
    %14 = arith.mulf %13, %13 : vector<2x32xf32>
    %cst_8 = arith.constant dense<0.000000e+00> : vector<2xf32>
    %15 = vector.multi_reduction <add>, %14, %cst_8 [1] : vector<2x32xf32> to vector<2xf32>
    %16 = vector.shape_cast %15 : vector<2xf32> to vector<2x1xf32>
    %cst_9 = arith.constant 3.200000e+01 : f32
    %17 = vector.broadcast %cst_9 : f32 to vector<2x1xf32>
    %18 = arith.divf %16, %17 : vector<2x1xf32>
    %19 = vector.broadcast %11 : vector<2x1xf32> to vector<2x32xf32>
    %20 = arith.subf %7, %19 : vector<2x32xf32>
    %cst_10 = arith.constant 9.99999974E-6 : f32
    %21 = vector.broadcast %cst_10 : f32 to vector<2x1xf32>
    %22 = arith.addf %18, %21 : vector<2x1xf32>
    %23 = math.rsqrt %22 : vector<2x1xf32>
    %24 = vector.broadcast %23 : vector<2x1xf32> to vector<2x32xf32>
    %25 = arith.mulf %20, %24 : vector<2x32xf32>
    %c0_11 = arith.constant 0 : index
    %c0_12 = arith.constant 0 : index
    %26 = vector.load %arg4[%c0_11, %c0_12] : memref<1x32xf32, #tpu.memory_space<vmem>>, vector<1x32xf32>
    %27 = vector.broadcast %26 : vector<1x32xf32> to vector<2x32xf32>
    %28 = arith.mulf %25, %27 : vector<2x32xf32>
    %c0_13 = arith.constant 0 : index
    %c0_14 = arith.constant 0 : index
    %29 = vector.load %arg5[%c0_13, %c0_14] : memref<1x32xf32, #tpu.memory_space<vmem>>, vector<1x32xf32>
    %30 = vector.broadcast %29 : vector<1x32xf32> to vector<2x32xf32>
    %31 = arith.addf %28, %30 : vector<2x32xf32>
    %c0_15 = arith.constant 0 : index
    %c0_16 = arith.constant 0 : index
    %32 = vector.load %arg6[%c0_15, %c0_16] : memref<32x32xf32, #tpu.memory_space<vmem>>, vector<32x32xf32>
    %cst_17 = arith.constant dense<0.000000e+00> : vector<2x32xf32>
    %33 = tpu.matmul %31, %32, %cst_17 {dimension_numbers = #tpu.dot_dimension_numbers<[1], [0], [0], [1], [0, 0, 1, 1], [], []>, precision = #tpu.contract_precision<fp32>} : vector<2x32xf32>, vector<32x32xf32>, vector<2x32xf32> -> vector<2x32xf32>
    %c0_18 = arith.constant 0 : index
    %c0_19 = arith.constant 0 : index
    %34 = vector.load %arg7[%c0_18, %c0_19] : memref<1x32xf32, #tpu.memory_space<vmem>>, vector<1x32xf32>
    %35 = vector.broadcast %34 : vector<1x32xf32> to vector<2x32xf32>
    %36 = arith.addf %33, %35 : vector<2x32xf32>
    %37 = math.tanh %36 : vector<2x32xf32>
    %c0_20 = arith.constant 0 : index
    %c0_21 = arith.constant 0 : index
    %38 = vector.load %arg8[%c0_20, %c0_21] : memref<32x10xf32, #tpu.memory_space<vmem>>, vector<32x10xf32>
    %cst_22 = arith.constant dense<0.000000e+00> : vector<2x10xf32>
    %39 = tpu.matmul %37, %38, %cst_22 {dimension_numbers = #tpu.dot_dimension_numbers<[1], [0], [0], [1], [0, 0, 1, 1], [], []>, precision = #tpu.contract_precision<fp32>} : vector<2x32xf32>, vector<32x10xf32>, vector<2x10xf32> -> vector<2x10xf32>
    %c0_23 = arith.constant 0 : index
    %c0_24 = arith.constant 0 : index
    %40 = vector.load %arg9[%c0_23, %c0_24] : memref<1x10xf32, #tpu.memory_space<vmem>>, vector<1x10xf32>
    %41 = vector.broadcast %40 : vector<1x10xf32> to vector<2x10xf32>
    %42 = arith.addf %39, %41 : vector<2x10xf32>
    %c0_25 = arith.constant 0 : index
    %c0_26 = arith.constant 0 : index
    %43 = vector.load %arg10[%c0_25, %c0_26] : memref<2x10xf32, #tpu.memory_space<vmem>>, vector<2x10xf32>
    tpu.vector_store %arg10[%c0_25, %c0_26], %42 {strides = array<i32>} : memref<2x10xf32, #tpu.memory_space<vmem>>, vector<2x10xf32>,
    return
  }
  func.func @transform_0(%arg0: i32) -> (i32, i32) {
    %c0_i32 = arith.constant 0 : i32
    %c0_i32_0 = arith.constant 0 : i32
    return %arg0, %c0_i32 : i32, i32
  }
  func.func @transform_1(%arg0: i32) -> (i32, i32) {
    %c0_i32 = arith.constant 0 : i32
    %c0_i32_0 = arith.constant 0 : i32
    %c0_i32_1 = arith.constant 0 : i32
    return %c0_i32, %c0_i32_0 : i32, i32
  }
  func.func @transform_2(%arg0: i32) -> (i32, i32) {
    %c0_i32 = arith.constant 0 : i32
    %c0_i32_0 = arith.constant 0 : i32
    %c0_i32_1 = arith.constant 0 : i32
    return %c0_i32, %c0_i32_0 : i32, i32
  }
  func.func @transform_3(%arg0: i32) -> (i32, i32) {
    %c0_i32 = arith.constant 0 : i32
    %c0_i32_0 = arith.constant 0 : i32
    %c0_i32_1 = arith.constant 0 : i32
    return %c0_i32, %c0_i32_0 : i32, i32
  }
  func.func @transform_4(%arg0: i32) -> (i32, i32) {
    %c0_i32 = arith.constant 0 : i32
    %c0_i32_0 = arith.constant 0 : i32
    %c0_i32_1 = arith.constant 0 : i32
    return %c0_i32, %c0_i32_0 : i32, i32
  }
  func.func @transform_5(%arg0: i32) -> (i32, i32) {
    %c0_i32 = arith.constant 0 : i32
    %c0_i32_0 = arith.constant 0 : i32
    %c0_i32_1 = arith.constant 0 : i32
    return %c0_i32, %c0_i32_0 : i32, i32
  }
  func.func @transform_6(%arg0: i32) -> (i32, i32) {
    %c0_i32 = arith.constant 0 : i32
    %c0_i32_0 = arith.constant 0 : i32
    %c0_i32_1 = arith.constant 0 : i32
    return %c0_i32, %c0_i32_0 : i32, i32
  }
  func.func @transform_7(%arg0: i32) -> (i32, i32) {
    %c0_i32 = arith.constant 0 : i32
    %c0_i32_0 = arith.constant 0 : i32
    %c0_i32_1 = arith.constant 0 : i32
    return %c0_i32, %c0_i32_0 : i32, i32
  }
  func.func @transform_8(%arg0: i32) -> (i32, i32) {
    %c0_i32 = arith.constant 0 : i32
    %c0_i32_0 = arith.constant 0 : i32
    %c0_i32_1 = arith.constant 0 : i32
    return %c0_i32, %c0_i32_0 : i32, i32
  }
  func.func @transform_9(%arg0: i32) -> (i32, i32) {
    %c0_i32 = arith.constant 0 : i32
    %c0_i32_0 = arith.constant 0 : i32
    return %arg0, %c0_i32 : i32, i32
  }
}

</mosaic_0001>

<llo_original>
// kernel: tpu_custom_call.1
$region0: #{tpu_custom_call.1}
  #allocation0 [shape = 'u32[]', space=smem, size = 0x4, offset = 0x4, fixed_abs, tag = 'smem constant byte address 0x4 - core index']
  #allocation1 [shape = 'u32[144,128]{1,0:T(1,128)}', space=vmem, size = 0x12000, scoped, tag = 'internal scratch']
  %s0 = inlined_call_operand.vmem [shape: f32[2,64], index: 0, kind: input, shape index: {}]
  %s1 = inlined_call_operand.vmem [shape: f32[64,32], index: 1, kind: input, shape index: {}]
  %s2 = inlined_call_operand.vmem [shape: f32[1,32], index: 2, kind: input, shape index: {}]
  %s3 = inlined_call_operand.vmem [shape: f32[1,32], index: 3, kind: input, shape index: {}]
  %s4 = inlined_call_operand.vmem [shape: f32[1,32], index: 4, kind: input, shape index: {}]
  %s5 = inlined_call_operand.vmem [shape: f32[32,32], index: 5, kind: input, shape index: {}]
  %s6 = inlined_call_operand.vmem [shape: f32[1,32], index: 6, kind: input, shape index: {}]
  %s7 = inlined_call_operand.vmem [shape: f32[32,10], index: 7, kind: input, shape index: {}]
  %s8 = inlined_call_operand.vmem [shape: f32[1,10], index: 8, kind: input, shape index: {}]
  %s9 = inlined_call_operand.hbm [shape: f32[2,10], index: 9, kind: output, shape index: {}]
  %s10 = sld [smem:[#allocation0]]
  $region46: #{tpu_custom_call.1} parent=0
    _
  %s12 = ssub.s32 1, %s10
  %s13 = scalar_select 0, %s12, %s10
  $region1: #{tpu_custom_call.1} parent=0
    #allocation2 [shape = 'u8[1024]{0}', space=vmem, size = 0x400, scoped, tag = 'output window, operand 0, single buffered']
    #allocation3 [shape = 's32[1]{0}', space=sflag, size = 0x4, scoped, tag = 'scoped memory for tpu_custom_call.1']
    %14 = vsyncpa [#allocation3], 0
    // Predicated region
    $region2: #{tpu_custom_call.1} parent=1 // pred_check
      _
    $region3: #{tpu_custom_call.1} parent=1 // pred_check_branch
      %16 = sbr.rel (0) target = $region5
    $region4: #{tpu_custom_call.1} parent=1 // pred_region
      _
    $region5: #{tpu_custom_call.1} parent=1 // pred_fallthru
      _
    // Predicated region
    $region6: #{tpu_custom_call.1} parent=1 // pred_check
      _
    $region7: #{tpu_custom_call.1} parent=1 // pred_check_branch
      %18 = sbr.rel (0) target = $region9
    $region8: #{tpu_custom_call.1} parent=1 // pred_region
      _
    $region9: #{tpu_custom_call.1} parent=1 // pred_fallthru
      _
    // Predicated region
    $region10: #{tpu_custom_call.1} parent=1 // pred_check
      _
    $region11: #{tpu_custom_call.1} parent=1 // pred_check_branch
      %20 = sbr.rel (0) target = $region13
    $region12: #{tpu_custom_call.1} parent=1 // pred_region
      _
    $region13: #{tpu_custom_call.1} parent=1 // pred_fallthru
      _
    // Predicated region
    $region14: #{tpu_custom_call.1} parent=1 // pred_check
      _
    $region15: #{tpu_custom_call.1} parent=1 // pred_check_branch
      %22 = sbr.rel (0) target = $region17
    $region16: #{tpu_custom_call.1} parent=1 // pred_region
      _
    $region17: #{tpu_custom_call.1} parent=1 // pred_fallthru
      _
    // Predicated region
    $region18: #{tpu_custom_call.1} parent=1 // pred_check
      _
    $region19: #{tpu_custom_call.1} parent=1 // pred_check_branch
      %24 = sbr.rel (0) target = $region21
    $region20: #{tpu_custom_call.1} parent=1 // pred_region
      _
    $region21: #{tpu_custom_call.1} parent=1 // pred_fallthru
      _
    // Predicated region
    $region22: #{tpu_custom_call.1} parent=1 // pred_check
      _
    $region23: #{tpu_custom_call.1} parent=1 // pred_check_branch
      %26 = sbr.rel (0) target = $region25
    $region24: #{tpu_custom_call.1} parent=1 // pred_region
      _
    $region25: #{tpu_custom_call.1} parent=1 // pred_fallthru
      _
    // Predicated region
    $region26: #{tpu_custom_call.1} parent=1 // pred_check
      _
    $region27: #{tpu_custom_call.1} parent=1 // pred_check_branch
      %28 = sbr.rel (0) target = $region29
    $region28: #{tpu_custom_call.1} parent=1 // pred_region
      _
    $region29: #{tpu_custom_call.1} parent=1 // pred_fallthru
      _
    // Predicated region
    $region30: #{tpu_custom_call.1} parent=1 // pred_check
      _
    $region31: #{tpu_custom_call.1} parent=1 // pred_check_branch
      %30 = sbr.rel (0) target = $region33
    $region32: #{tpu_custom_call.1} parent=1 // pred_region
      _
    $region33: #{tpu_custom_call.1} parent=1 // pred_fallthru
      _
    // Predicated region
    $region34: #{tpu_custom_call.1} parent=1 // pred_check
      _
    $region35: #{tpu_custom_call.1} parent=1 // pred_check_branch
      %32 = sbr.rel (0) target = $region37
    $region36: #{tpu_custom_call.1} parent=1 // pred_region
      _
    $region37: #{tpu_custom_call.1} parent=1 // pred_fallthru
      _
    %v33 = vld [vmem:[%s0] sm:$0x3]
    %v34 = vld [vmem:[%s1] sm:$0xff]
    %v35 = vld [vmem:[%s1 + $0x8] sm:$0xff]
    %v36 = vld [vmem:[%s1 + $0x10] sm:$0xff]
    %v37 = vld [vmem:[%s1 + $0x18] sm:$0xff]
    %v38 = vld [vmem:[%s1 + $0x20] sm:$0xff]
    %v39 = vld [vmem:[%s1 + $0x28] sm:$0xff]
    %v40 = vld [vmem:[%s1 + $0x30] sm:$0xff]
    %v41 = vld [vmem:[%s1 + $0x38] sm:$0xff]
    %v42 = vld [vmem:[%s2] sm:$0x1]
    %v44 = vlaneseq
    %v45 = vshrl.u32 %v44, 7
    %v46 = vsub.s32 0, %v45
    %v47 = vrot.slane %v42, %v46
    %vm49 = vcmask 523264
    %v51 = vsel %vm49, %v33, 0
    %53 = vmatprep.subr.mxu0 0.0
    %v54 = vand.u32 %v34, 4294901760
    %55 = vmatpush1.msra.mxu0 %v54
    %56 = vmatprep.subr.mxu0 0.0
    %v57 = vand.u32 %v35, 4294901760
    %58 = vmatpush1.msra.mxu0 %v57
    %59 = vmatprep.subr.mxu0 0.0
    %v60 = vand.u32 %v36, 4294901760
    %61 = vmatpush1.msra.mxu0 %v60
    %62 = vmatprep.subr.mxu0 0.0
    %v63 = vand.u32 %v37, 4294901760
    %64 = vmatpush1.msra.mxu0 %v63
    %65 = vmatprep.subr.mxu0 0.0
    %v66 = vand.u32 %v38, 4294901760
    %67 = vmatpush1.msra.mxu0 %v66
    %68 = vmatprep.subr.mxu0 0.0
    %v69 = vand.u32 %v39, 4294901760
    %70 = vmatpush1.msra.mxu0 %v69
    %71 = vmatprep.subr.mxu0 0.0
    %v72 = vand.u32 %v40, 4294901760
    %73 = vmatpush1.msra.mxu0 %v72
    %74 = vmatprep.subr.mxu0 0.0
    %v75 = vand.u32 %v41, 4294901760
    %76 = vmatpush1.msra.mxu0 %v75
    %77 = vmatprep.subr.mxu0 0.0
    %78 = vmatpush1.msra.mxu0 0.0
    %79 = vmatprep.subr.mxu0 0.0
    %80 = vmatpush1.msra.mxu0 0.0
    %81 = vmatprep.subr.mxu0 0.0
    %82 = vmatpush1.msra.mxu0 0.0
    %83 = vmatprep.subr.mxu0 0.0
    %84 = vmatpush1.msra.mxu0 0.0
    %85 = vmatprep.subr.mxu0 0.0
    %86 = vmatpush1.msra.mxu0 0.0
    %87 = vmatprep.subr.mxu0 0.0
    %88 = vmatpush1.msra.mxu0 0.0
    %89 = vmatprep.subr.mxu0 0.0
    %90 = vmatpush1.msra.mxu0 0.0
    %91 = vmatprep.subr.mxu0 0.0
    %92 = vmatpush1.msra.mxu0 0.0
    %93 = vmatprep.subr.mxu0 0.0
    %94 = vmatpush1.msra.mxu0 0.0
    %95 = vmatprep.subr.mxu0 0.0
    %96 = vmatpush1.msra.mxu0 0.0
    %97 = vmatprep.subr.mxu0 0.0
    %98 = vmatpush1.msra.mxu0 0.0
    %99 = vmatprep.subr.mxu0 0.0
    %100 = vmatpush1.msra.mxu0 0.0
    %101 = vmatprep.subr.mxu0 0.0
    %102 = vmatpush1.msra.mxu0 0.0
    %103 = vmatprep.subr.mxu0 0.0
    %104 = vmatpush1.msra.mxu0 0.0
    %105 = vmatprep.subr.mxu0 0.0
    %106 = vmatpush1.msra.mxu0 0.0
    %107 = vmatprep.subr.mxu0 0.0
    %108 = vmatpush1.msra.mxu0 0.0
    %109 = vmatprep.subr.mxu0 0.0
    %110 = vmatpush1.msra.mxu0 0.0
    %111 = vmatprep.subr.mxu0 0.0
    %112 = vmatpush1.msra.mxu0 0.0
    %113 = vmatprep.subr.mxu0 0.0
    %114 = vmatpush1.msra.mxu0 0.0
    %115 = vmatprep.subr.mxu0 0.0
    %116 = vmatpush1.msra.mxu0 0.0
    %117 = vmatprep.subr.mxu0 0.0
    %118 = vmatpush1.msra.mxu0 0.0
    %119 = vmatprep.subr.mxu0 0.0
    %120 = vmatpush1.msra.mxu0 0.0
    %121 = vmatprep.subr.mxu0 0.0
    %122 = vmatpush1.msra.mxu0 0.0
    %123 = vmatprep.subr.mxu0 0.0
    %124 = vmatpush1.msra.mxu0 0.0
    %125 = vmatprep.mubr.f32.mxu0 0.0
    %v126 = vand.u32 %v51, 4294901760
    %v127 = vsub.f32 %v51, %v126
    %v128 = vand.u32 %v127, 4294901760
    %v129 = vsub.f32 %v127, %v128
    %v130 = vand.u32 %v129, 4294901760
    %131 = vmatmul.mubr.f32.gmra.mrb[0].mxu0 %v130
    %v132 = vpop.f32.mrb[0].mxu0
    %v133 = vadd.f32 %v47, %v132
    %v134 = vpop.f32.mrb[0].mxu0
    %135 = vdwg.mxu0
    %136 = vmatprep.subr.mxu0 0.0
    %v137 = vand.u32 %v34, 4294901760
    %v138 = vsub.f32 %v34, %v137
    %v139 = vand.u32 %v138, 4294901760
    %v140 = vsub.f32 %v138, %v139
    %v141 = vand.u32 %v140, 4294901760
    %142 = vmatpush1.msra.mxu0 %v141
    %143 = vmatprep.subr.mxu0 0.0
    %v144 = vand.u32 %v35, 4294901760
    %v145 = vsub.f32 %v35, %v144
    %v146 = vand.u32 %v145, 4294901760
    %v147 = vsub.f32 %v145, %v146
    %v148 = vand.u32 %v147, 4294901760
    %149 = vmatpush1.msra.mxu0 %v148
    %150 = vmatprep.subr.mxu0 0.0
    %v151 = vand.u32 %v36, 4294901760
    %v152 = vsub.f32 %v36, %v151
    %v153 = vand.u32 %v152, 4294901760
    %v154 = vsub.f32 %v152, %v153
    %v155 = vand.u32 %v154, 4294901760
    %156 = vmatpush1.msra.mxu0 %v155
    %157 = vmatprep.subr.mxu0 0.0
    %v158 = vand.u32 %v37, 4294901760
    %v159 = vsub.f32 %v37, %v158
    %v160 = vand.u32 %v159, 4294901760
    %v161 = vsub.f32 %v159, %v160
    %v162 = vand.u32 %v161, 4294901760
    %163 = vmatpush1.msra.mxu0 %v162
    %164 = vmatprep.subr.mxu0 0.0
    %v165 = vand.u32 %v38, 4294901760
    %v166 = vsub.f32 %v38, %v165
    %v167 = vand.u32 %v166, 4294901760
    %v168 = vsub.f32 %v166, %v167
    %v169 = vand.u32 %v168, 4294901760
    %170 = vmatpush1.msra.mxu0 %v169
    %171 = vmatprep.subr.mxu0 0.0
    %v172 = vand.u32 %v39, 4294901760
    %v173 = vsub.f32 %v39, %v172
    %v174 = vand.u32 %v173, 4294901760
    %v175 = vsub.f32 %v173, %v174
    %v176 = vand.u32 %v175, 4294901760
    %177 = vmatpush1.msra.mxu0 %v176
    %178 = vmatprep.subr.mxu0 0.0
    %v179 = vand.u32 %v40, 4294901760
    %v180 = vsub.f32 %v40, %v179
    %v181 = vand.u32 %v180, 4294901760
    %v182 = vsub.f32 %v180, %v181
    %v183 = vand.u32 %v182, 4294901760
    %184 = vmatpush1.msra.mxu0 %v183
    %185 = vmatprep.subr.mxu0 0.0
    %v186 = vand.u32 %v41, 4294901760
    %v187 = vsub.f32 %v41, %v186
    %v188 = vand.u32 %v187, 4294901760
    %v189 = vsub.f32 %v187, %v188
    %v190 = vand.u32 %v189, 4294901760
    %191 = vmatpush1.msra.mxu0 %v190
    %192 = vmatprep.subr.mxu0 0.0
    %193 = vmatpush1.msra.mxu0 0.0
    %194 = vmatprep.subr.mxu0 0.0
    %195 = vmatpush1.msra.mxu0 0.0
    %196 = vmatprep.subr.mxu0 0.0
    %197 = vmatpush1.msra.mxu0 0.0
    %198 = vmatprep.subr.mxu0 0.0
    %199 = vmatpush1.msra.mxu0 0.0
    %200 = vmatprep.subr.mxu0 0.0
    %201 = vmatpush1.msra.mxu0 0.0
    %202 = vmatprep.subr.mxu0 0.0
    %203 = vmatpush1.msra.mxu0 0.0
    %204 = vmatprep.subr.mxu0 0.0
    %205 = vmatpush1.msra.mxu0 0.0
    %206 = vmatprep.subr.mxu0 0.0
    %207 = vmatpush1.msra.mxu0 0.0
    %208 = vmatprep.subr.mxu0 0.0
    %209 = vmatpush1.msra.mxu0 0.0
    %210 = vmatprep.subr.mxu0 0.0
    %211 = vmatpush1.msra.mxu0 0.0
    %212 = vmatprep.subr.mxu0 0.0
    %213 = vmatpush1.msra.mxu0 0.0
    %214 = vmatprep.subr.mxu0 0.0
    %215 = vmatpush1.msra.mxu0 0.0
    %216 = vmatprep.subr.mxu0 0.0
    %217 = vmatpush1.msra.mxu0 0.0
    %218 = vmatprep.subr.mxu0 0.0
    %219 = vmatpush1.msra.mxu0 0.0
    %220 = vmatprep.subr.mxu0 0.0
    %221 = vmatpush1.msra.mxu0 0.0
    %222 = vmatprep.subr.mxu0 0.0
    %223 = vmatpush1.msra.mxu0 0.0
    %224 = vmatprep.subr.mxu0 0.0
    %225 = vmatpush1.msra.mxu0 0.0
    %226 = vmatprep.subr.mxu0 0.0
    %227 = vmatpush1.msra.mxu0 0.0
    %228 = vmatprep.subr.mxu0 0.0
    %229 = vmatpush1.msra.mxu0 0.0
    %230 = vmatprep.subr.mxu0 0.0
    %231 = vmatpush1.msra.mxu0 0.0
    %232 = vmatprep.subr.mxu0 0.0
    %233 = vmatpush1.msra.mxu0 0.0
    %234 = vmatprep.subr.mxu0 0.0
    %235 = vmatpush1.msra.mxu0 0.0
    %236 = vmatprep.subr.mxu0 0.0
    %237 = vmatpush1.msra.mxu0 0.0
    %238 = vmatprep.subr.mxu0 0.0
    %239 = vmatpush1.msra.mxu0 0.0
    %240 = vmatprep.mubr.f32.mxu0 0.0
    %v241 = vand.u32 %v51, 4294901760
    %242 = vmatmul.mubr.f32.gmra.mrb[0].mxu0 %v241
    %v243 = vpop.f32.mrb[0].mxu0
    %v244 = vadd.f32 %v133, %v243
    %v245 = vpop.f32.mrb[0].mxu0
    %246 = vdwg.mxu0
    %247 = vmatprep.subr.mxu0 0.0
    %v248 = vand.u32 %v34, 4294901760
    %v249 = vsub.f32 %v34, %v248
    %250 = vmatpush1.msra.mxu0 %v249
    %251 = vmatprep.subr.mxu0 0.0
    %v252 = vand.u32 %v35, 4294901760
    %v253 = vsub.f32 %v35, %v252
    %254 = vmatpush1.msra.mxu0 %v253
    %255 = vmatprep.subr.mxu0 0.0
    %v256 = vand.u32 %v36, 4294901760
    %v257 = vsub.f32 %v36, %v256
    %258 = vmatpush1.msra.mxu0 %v257
    %259 = vmatprep.subr.mxu0 0.0
    %v260 = vand.u32 %v37, 4294901760
    %v261 = vsub.f32 %v37, %v260
    %262 = vmatpush1.msra.mxu0 %v261
    %263 = vmatprep.subr.mxu0 0.0
    %v264 = vand.u32 %v38, 4294901760
    %v265 = vsub.f32 %v38, %v264
    %266 = vmatpush1.msra.mxu0 %v265
    %267 = vmatprep.subr.mxu0 0.0
    %v268 = vand.u32 %v39, 4294901760
    %v269 = vsub.f32 %v39, %v268
    %270 = vmatpush1.msra.mxu0 %v269
    %271 = vmatprep.subr.mxu0 0.0
    %v272 = vand.u32 %v40, 4294901760
    %v273 = vsub.f32 %v40, %v272
    %274 = vmatpush1.msra.mxu0 %v273
    %275 = vmatprep.subr.mxu0 0.0
    %v276 = vand.u32 %v41, 4294901760
    %v277 = vsub.f32 %v41, %v276
    %278 = vmatpush1.msra.mxu0 %v277
    %279 = vmatprep.subr.mxu0 0.0
    %280 = vmatpush1.msra.mxu0 0.0
    %281 = vmatprep.subr.mxu0 0.0
    %282 = vmatpush1.msra.mxu0 0.0
    %283 = vmatprep.subr.mxu0 0.0
    %284 = vmatpush1.msra.mxu0 0.0
    %285 = vmatprep.subr.mxu0 0.0
    %286 = vmatpush1.msra.mxu0 0.0
    %287 = vmatprep.subr.mxu0 0.0
    %288 = vmatpush1.msra.mxu0 0.0
    %289 = vmatprep.subr.mxu0 0.0
    %290 = vmatpush1.msra.mxu0 0.0
    %291 = vmatprep.subr.mxu0 0.0
    %292 = vmatpush1.msra.mxu0 0.0
    %293 = vmatprep.subr.mxu0 0.0
    %294 = vmatpush1.msra.mxu0 0.0
    %295 = vmatprep.subr.mxu0 0.0
    %296 = vmatpush1.msra.mxu0 0.0
    %297 = vmatprep.subr.mxu0 0.0
    %298 = vmatpush1.msra.mxu0 0.0
    %299 = vmatprep.subr.mxu0 0.0
    %300 = vmatpush1.msra.mxu0 0.0
    %301 = vmatprep.subr.mxu0 0.0
    %302 = vmatpush1.msra.mxu0 0.0
    %303 = vmatprep.subr.mxu0 0.0
    %304 = vmatpush1.msra.mxu0 0.0
    %305 = vmatprep.subr.mxu0 0.0
    %306 = vmatpush1.msra.mxu0 0.0
    %307 = vmatprep.subr.mxu0 0.0
    %308 = vmatpush1.msra.mxu0 0.0
    %309 = vmatprep.subr.mxu0 0.0
    %310 = vmatpush1.msra.mxu0 0.0
    %311 = vmatprep.subr.mxu0 0.0
    %312 = vmatpush1.msra.mxu0 0.0
    %313 = vmatprep.subr.mxu0 0.0
    %314 = vmatpush1.msra.mxu0 0.0
    %315 = vmatprep.subr.mxu0 0.0
    %316 = vmatpush1.msra.mxu0 0.0
    %317 = vmatprep.subr.mxu0 0.0
    %318 = vmatpush1.msra.mxu0 0.0
    %319 = vmatprep.subr.mxu0 0.0
    %320 = vmatpush1.msra.mxu0 0.0
    %321 = vmatprep.subr.mxu0 0.0
    %322 = vmatpush1.msra.mxu0 0.0
    %323 = vmatprep.subr.mxu0 0.0
    %324 = vmatpush1.msra.mxu0 0.0
    %325 = vmatprep.subr.mxu0 0.0
    %326 = vmatpush1.msra.mxu0 0.0
    %327 = vmatprep.mubr.f32.mxu0 0.0
    %v328 = vand.u32 %v51, 4294901760
    %v329 = vsub.f32 %v51, %v328
    %330 = vmatmul.mubr.f32.gmra.mrb[0].mxu0 %v329
    %v331 = vpop.f32.mrb[0].mxu0
    %v332 = vadd.f32 %v244, %v331
    %v333 = vpop.f32.mrb[0].mxu0
    %334 = vdwg.mxu0
    %335 = vmatprep.subr.mxu0 0.0
    %v336 = vand.u32 %v34, 4294901760
    %337 = vmatpush1.msra.mxu0 %v336
    %338 = vmatprep.subr.mxu0 0.0
    %v339 = vand.u32 %v35, 4294901760
    %340 = vmatpush1.msra.mxu0 %v339
    %341 = vmatprep.subr.mxu0 0.0
    %v342 = vand.u32 %v36, 4294901760
    %343 = vmatpush1.msra.mxu0 %v342
    %344 = vmatprep.subr.mxu0 0.0
    %v345 = vand.u32 %v37, 4294901760
    %346 = vmatpush1.msra.mxu0 %v345
    %347 = vmatprep.subr.mxu0 0.0
    %v348 = vand.u32 %v38, 4294901760
    %349 = vmatpush1.msra.mxu0 %v348
    %350 = vmatprep.subr.mxu0 0.0
    %v351 = vand.u32 %v39, 4294901760
    %352 = vmatpush1.msra.mxu0 %v351
    %353 = vmatprep.subr.mxu0 0.0
    %v354 = vand.u32 %v40, 4294901760
    %355 = vmatpush1.msra.mxu0 %v354
    %356 = vmatprep.subr.mxu0 0.0
    %v357 = vand.u32 %v41, 4294901760
    %358 = vmatpush1.msra.mxu0 %v357
    %359 = vmatprep.subr.mxu0 0.0
    %360 = vmatpush1.msra.mxu0 0.0
    %361 = vmatprep.subr.mxu0 0.0
    %362 = vmatpush1.msra.mxu0 0.0
    %363 = vmatprep.subr.mxu0 0.0
    %364 = vmatpush1.msra.mxu0 0.0
    %365 = vmatprep.subr.mxu0 0.0
    %366 = vmatpush1.msra.mxu0 0.0
    %367 = vmatprep.subr.mxu0 0.0
    %368 = vmatpush1.msra.mxu0 0.0
    %369 = vmatprep.subr.mxu0 0.0
    %370 = vmatpush1.msra.mxu0 0.0
    %371 = vmatprep.subr.mxu0 0.0
    %372 = vmatpush1.msra.mxu0 0.0
    %373 = vmatprep.subr.mxu0 0.0
    %374 = vmatpush1.msra.mxu0 0.0
    %375 = vmatprep.subr.mxu0 0.0
    %376 = vmatpush1.msra.mxu0 0.0
    %377 = vmatprep.subr.mxu0 0.0
    %378 = vmatpush1.msra.mxu0 0.0
    %379 = vmatprep.subr.mxu0 0.0
    %380 = vmatpush1.msra.mxu0 0.0
    %381 = vmatprep.subr.mxu0 0.0
    %382 = vmatpush1.msra.mxu0 0.0
    %383 = vmatprep.subr.mxu0 0.0
    %384 = vmatpush1.msra.mxu0 0.0
    %385 = vmatprep.subr.mxu0 0.0
    %386 = vmatpush1.msra.mxu0 0.0
    %387 = vmatprep.subr.mxu0 0.0
    %388 = vmatpush1.msra.mxu0 0.0
    %389 = vmatprep.subr.mxu0 0.0
    %390 = vmatpush1.msra.mxu0 0.0
    %391 = vmatprep.subr.mxu0 0.0
    %392 = vmatpush1.msra.mxu0 0.0
    %393 = vmatprep.subr.mxu0 0.0
    %394 = vmatpush1.msra.mxu0 0.0
    %395 = vmatprep.subr.mxu0 0.0
    %396 = vmatpush1.msra.mxu0 0.0
    %397 = vmatprep.subr.mxu0 0.0
    %398 = vmatpush1.msra.mxu0 0.0
    %399 = vmatprep.subr.mxu0 0.0
    %400 = vmatpush1.msra.mxu0 0.0
    %401 = vmatprep.subr.mxu0 0.0
    %402 = vmatpush1.msra.mxu0 0.0
    %403 = vmatprep.subr.mxu0 0.0
    %404 = vmatpush1.msra.mxu0 0.0
    %405 = vmatprep.subr.mxu0 0.0
    %406 = vmatpush1.msra.mxu0 0.0
    %407 = vmatprep.mubr.f32.mxu0 0.0
    %v408 = vand.u32 %v51, 4294901760
    %v409 = vsub.f32 %v51, %v408
    %v410 = vand.u32 %v409, 4294901760
    %411 = vmatmul.mubr.f32.gmra.mrb[0].mxu0 %v410
    %v412 = vpop.f32.mrb[0].mxu0
    %v413 = vadd.f32 %v332, %v412
    %v414 = vpop.f32.mrb[0].mxu0
    %415 = vdwg.mxu0
    %416 = vmatprep.subr.mxu0 0.0
    %v417 = vand.u32 %v34, 4294901760
    %v418 = vsub.f32 %v34, %v417
    %v419 = vand.u32 %v418, 4294901760
    %420 = vmatpush1.msra.mxu0 %v419
    %421 = vmatprep.subr.mxu0 0.0
    %v422 = vand.u32 %v35, 4294901760
    %v423 = vsub.f32 %v35, %v422
    %v424 = vand.u32 %v423, 4294901760
    %425 = vmatpush1.msra.mxu0 %v424
    %426 = vmatprep.subr.mxu0 0.0
    %v427 = vand.u32 %v36, 4294901760
    %v428 = vsub.f32 %v36, %v427
    %v429 = vand.u32 %v428, 4294901760
    %430 = vmatpush1.msra.mxu0 %v429
    %431 = vmatprep.subr.mxu0 0.0
    %v432 = vand.u32 %v37, 4294901760
    %v433 = vsub.f32 %v37, %v432
    %v434 = vand.u32 %v433, 4294901760
    %435 = vmatpush1.msra.mxu0 %v434
    %436 = vmatprep.subr.mxu0 0.0
    %v437 = vand.u32 %v38, 4294901760
    %v438 = vsub.f32 %v38, %v437
    %v439 = vand.u32 %v438, 4294901760
    %440 = vmatpush1.msra.mxu0 %v439
    %441 = vmatprep.subr.mxu0 0.0
    %v442 = vand.u32 %v39, 4294901760
    %v443 = vsub.f32 %v39, %v442
    %v444 = vand.u32 %v443, 4294901760
    %445 = vmatpush1.msra.mxu0 %v444
    %446 = vmatprep.subr.mxu0 0.0
    %v447 = vand.u32 %v40, 4294901760
    %v448 = vsub.f32 %v40, %v447
    %v449 = vand.u32 %v448, 4294901760
    %450 = vmatpush1.msra.mxu0 %v449
    %451 = vmatprep.subr.mxu0 0.0
    %v452 = vand.u32 %v41, 4294901760
    %v453 = vsub.f32 %v41, %v452
    %v454 = vand.u32 %v453, 4294901760
    %455 = vmatpush1.msra.mxu0 %v454
    %456 = vmatprep.subr.mxu0 0.0
    %457 = vmatpush1.msra.mxu0 0.0
    %458 = vmatprep.subr.mxu0 0.0
    %459 = vmatpush1.msra.mxu0 0.0
    %460 = vmatprep.subr.mxu0 0.0
    %461 = vmatpush1.msra.mxu0 0.0
    %462 = vmatprep.subr.mxu0 0.0
    %463 = vmatpush1.msra.mxu0 0.0
    %464 = vmatprep.subr.mxu0 0.0
    %465 = vmatpush1.msra.mxu0 0.0
    %466 = vmatprep.subr.mxu0 0.0
    %467 = vmatpush1.msra.mxu0 0.0
    %468 = vmatprep.subr.mxu0 0.0
    %469 = vmatpush1.msra.mxu0 0.0
    %470 = vmatprep.subr.mxu0 0.0
    %471 = vmatpush1.msra.mxu0 0.0
    %472 = vmatprep.subr.mxu0 0.0
    %473 = vmatpush1.msra.mxu0 0.0
    %474 = vmatprep.subr.mxu0 0.0
    %475 = vmatpush1.msra.mxu0 0.0
    %476 = vmatprep.subr.mxu0 0.0
    %477 = vmatpush1.msra.mxu0 0.0
    %478 = vmatprep.subr.mxu0 0.0
    %479 = vmatpush1.msra.mxu0 0.0
    %480 = vmatprep.subr.mxu0 0.0
    %481 = vmatpush1.msra.mxu0 0.0
    %482 = vmatprep.subr.mxu0 0.0
    %483 = vmatpush1.msra.mxu0 0.0
    %484 = vmatprep.subr.mxu0 0.0
    %485 = vmatpush1.msra.mxu0 0.0
    %486 = vmatprep.subr.mxu0 0.0
    %487 = vmatpush1.msra.mxu0 0.0
    %488 = vmatprep.subr.mxu0 0.0
    %489 = vmatpush1.msra.mxu0 0.0
    %490 = vmatprep.subr.mxu0 0.0
    %491 = vmatpush1.msra.mxu0 0.0
    %492 = vmatprep.subr.mxu0 0.0
    %493 = vmatpush1.msra.mxu0 0.0
    %494 = vmatprep.subr.mxu0 0.0
    %495 = vmatpush1.msra.mxu0 0.0
    %496 = vmatprep.subr.mxu0 0.0
    %497 = vmatpush1.msra.mxu0 0.0
    %498 = vmatprep.subr.mxu0 0.0
    %499 = vmatpush1.msra.mxu0 0.0
    %500 = vmatprep.subr.mxu0 0.0
    %501 = vmatpush1.msra.mxu0 0.0
    %502 = vmatprep.subr.mxu0 0.0
    %503 = vmatpush1.msra.mxu0 0.0
    %504 = vmatprep.mubr.f32.mxu0 0.0
    %v505 = vand.u32 %v51, 4294901760
    %506 = vmatmul.mubr.f32.gmra.mrb[0].mxu0 %v505
    %v507 = vpop.f32.mrb[0].mxu0
    %v508 = vadd.f32 %v413, %v507
    %v509 = vpop.f32.mrb[0].mxu0
    %510 = vdwg.mxu0
    %511 = vmatprep.subr.mxu0 0.0
    %v512 = vand.u32 %v34, 4294901760
    %513 = vmatpush1.msra.mxu0 %v512
    %514 = vmatprep.subr.mxu0 0.0
    %v515 = vand.u32 %v35, 4294901760
    %516 = vmatpush1.msra.mxu0 %v515
    %517 = vmatprep.subr.mxu0 0.0
    %v518 = vand.u32 %v36, 4294901760
    %519 = vmatpush1.msra.mxu0 %v518
    %520 = vmatprep.subr.mxu0 0.0
    %v521 = vand.u32 %v37, 4294901760
    %522 = vmatpush1.msra.mxu0 %v521
    %523 = vmatprep.subr.mxu0 0.0
    %v524 = vand.u32 %v38, 4294901760
    %525 = vmatpush1.msra.mxu0 %v524
    %526 = vmatprep.subr.mxu0 0.0
    %v527 = vand.u32 %v39, 4294901760
    %528 = vmatpush1.msra.mxu0 %v527
    %529 = vmatprep.subr.mxu0 0.0
    %v530 = vand.u32 %v40, 4294901760
    %531 = vmatpush1.msra.mxu0 %v530
    %532 = vmatprep.subr.mxu0 0.0
    %v533 = vand.u32 %v41, 4294901760
    %534 = vmatpush1.msra.mxu0 %v533
    %535 = vmatprep.subr.mxu0 0.0
    %536 = vmatpush1.msra.mxu0 0.0
    %537 = vmatprep.subr.mxu0 0.0
    %538 = vmatpush1.msra.mxu0 0.0
    %539 = vmatprep.subr.mxu0 0.0
    %540 = vmatpush1.msra.mxu0 0.0
    %541 = vmatprep.subr.mxu0 0.0
    %542 = vmatpush1.msra.mxu0 0.0
    %543 = vmatprep.subr.mxu0 0.0
    %544 = vmatpush1.msra.mxu0 0.0
    %545 = vmatprep.subr.mxu0 0.0
    %546 = vmatpush1.msra.mxu0 0.0
    %547 = vmatprep.subr.mxu0 0.0
    %548 = vmatpush1.msra.mxu0 0.0
    %549 = vmatprep.subr.mxu0 0.0
    %550 = vmatpush1.msra.mxu0 0.0
    %551 = vmatprep.subr.mxu0 0.0
    %552 = vmatpush1.msra.mxu0 0.0
    %553 = vmatprep.subr.mxu0 0.0
    %554 = vmatpush1.msra.mxu0 0.0
    %555 = vmatprep.subr.mxu0 0.0
    %556 = vmatpush1.msra.mxu0 0.0
    %557 = vmatprep.subr.mxu0 0.0
    %558 = vmatpush1.msra.mxu0 0.0
    %559 = vmatprep.subr.mxu0 0.0
    %560 = vmatpush1.msra.mxu0 0.0
    %561 = vmatprep.subr.mxu0 0.0
    %562 = vmatpush1.msra.mxu0 0.0
    %563 = vmatprep.subr.mxu0 0.0
    %564 = vmatpush1.msra.mxu0 0.0
    %565 = vmatprep.subr.mxu0 0.0
    %566 = vmatpush1.msra.mxu0 0.0
    %567 = vmatprep.subr.mxu0 0.0
    %568 = vmatpush1.msra.mxu0 0.0
    %569 = vmatprep.subr.mxu0 0.0
    %570 = vmatpush1.msra.mxu0 0.0
    %571 = vmatprep.subr.mxu0 0.0
    %572 = vmatpush1.msra.mxu0 0.0
    %573 = vmatprep.subr.mxu0 0.0
    %574 = vmatpush1.msra.mxu0 0.0
    %575 = vmatprep.subr.mxu0 0.0
    %576 = vmatpush1.msra.mxu0 0.0
    %577 = vmatprep.subr.mxu0 0.0
    %578 = vmatpush1.msra.mxu0 0.0
    %579 = vmatprep.subr.mxu0 0.0
    %580 = vmatpush1.msra.mxu0 0.0
    %581 = vmatprep.subr.mxu0 0.0
    %582 = vmatpush1.msra.mxu0 0.0
    %583 = vmatprep.mubr.f32.mxu0 0.0
    %v584 = vand.u32 %v51, 4294901760
    %585 = vmatmul.mubr.f32.gmra.mrb[0].mxu0 %v584
    %v586 = vpop.f32.mrb[0].mxu0
    %v587 = vadd.f32 %v508, %v586
    %v588 = vpop.f32.mrb[0].mxu0
    %589 = vdwg.mxu0
    %v590 = vmax.f32 %v587, 0.0
    %vm591 = vcmask 254976
    %v592 = vsel %vm591, %v590, 0.0
    %593 = vadd.xlane.f32.xlu0 %v592
    %v594 = vpop.xlane.xlu0 %593
    %v595 = vrcp.pop 32.0
    %v596 = vmul.f32 %v594, %v595
    %v597 = vsub.f32 %v590, %v596
    %v598 = vmul.f32 %v597, %v597
    %v599 = vsel %vm591, %v598, 0.0
    %600 = vadd.xlane.f32.xlu0 %v599
    %v601 = vpop.xlane.xlu0 %600
    %v602 = vmul.f32 %v601, %v595
    %v603 = vadd.f32 %v602, 1e-05
    %v604 = vrsqrt.pop %v603
    %v605 = vmul.f32 %v597, %v604
    %v606 = vld [vmem:[%s3] sm:$0x1]
    %v608 = vlaneseq
    %v609 = vshrl.u32 %v608, 7
    %v610 = vsub.s32 0, %v609
    %v611 = vrot.slane %v606, %v610
    %v613 = vmul.f32 %v605, %v611
    %v614 = vld [vmem:[%s4] sm:$0x1]
    %v616 = vlaneseq
    %v617 = vshrl.u32 %v616, 7
    %v618 = vsub.s32 0, %v617
    %v619 = vrot.slane %v614, %v618
    %v621 = vadd.f32 %v613, %v619
    %v622 = vld [vmem:[%s5] sm:$0xff]
    %v623 = vld [vmem:[%s5 + $0x8] sm:$0xff]
    %v624 = vld [vmem:[%s5 + $0x10] sm:$0xff]
    %v625 = vld [vmem:[%s5 + $0x18] sm:$0xff]
    %v626 = vld [vmem:[%s6] sm:$0x1]
    %v628 = vlaneseq
    %v629 = vshrl.u32 %v628, 7
    %v630 = vsub.s32 0, %v629
    %v631 = vrot.slane %v626, %v630
    %vm633 = vcmask 261120
    %v635 = vsel %vm633, %v621, 0
    %637 = vmatprep.subr.mxu0 0.0
    %v638 = vand.u32 %v622, 4294901760
    %639 = vmatpush1.msra.mxu0 %v638
    %640 = vmatprep.subr.mxu0 0.0
    %v641 = vand.u32 %v623, 4294901760
    %642 = vmatpush1.msra.mxu0 %v641
    %643 = vmatprep.subr.mxu0 0.0
    %v644 = vand.u32 %v624, 4294901760
    %645 = vmatpush1.msra.mxu0 %v644
    %646 = vmatprep.subr.mxu0 0.0
    %v647 = vand.u32 %v625, 4294901760
    %648 = vmatpush1.msra.mxu0 %v647
    %649 = vmatprep.subr.mxu0 0.0
    %650 = vmatpush1.msra.mxu0 0.0
    %651 = vmatprep.subr.mxu0 0.0
    %652 = vmatpush1.msra.mxu0 0.0
    %653 = vmatprep.subr.mxu0 0.0
    %654 = vmatpush1.msra.mxu0 0.0
    %655 = vmatprep.subr.mxu0 0.0
    %656 = vmatpush1.msra.mxu0 0.0
    %657 = vmatprep.subr.mxu0 0.0
    %658 = vmatpush1.msra.mxu0 0.0
    %659 = vmatprep.subr.mxu0 0.0
    %660 = vmatpush1.msra.mxu0 0.0
    %661 = vmatprep.subr.mxu0 0.0
    %662 = vmatpush1.msra.mxu0 0.0
    %663 = vmatprep.subr.mxu0 0.0
    %664 = vmatpush1.msra.mxu0 0.0
    %665 = vmatprep.subr.mxu0 0.0
    %666 = vmatpush1.msra.mxu0 0.0
    %667 = vmatprep.subr.mxu0 0.0
    %668 = vmatpush1.msra.mxu0 0.0
    %669 = vmatprep.subr.mxu0 0.0
    %670 = vmatpush1.msra.mxu0 0.0
    %671 = vmatprep.subr.mxu0 0.0
    %672 = vmatpush1.msra.mxu0 0.0
    %673 = vmatprep.subr.mxu0 0.0
    %674 = vmatpush1.msra.mxu0 0.0
    %675 = vmatprep.subr.mxu0 0.0
    %676 = vmatpush1.msra.mxu0 0.0
    %677 = vmatprep.subr.mxu0 0.0
    %678 = vmatpush1.msra.mxu0 0.0
    %679 = vmatprep.subr.mxu0 0.0
    %680 = vmatpush1.msra.mxu0 0.0
    %681 = vmatprep.subr.mxu0 0.0
    %682 = vmatpush1.msra.mxu0 0.0
    %683 = vmatprep.subr.mxu0 0.0
    %684 = vmatpush1.msra.mxu0 0.0
    %685 = vmatprep.subr.mxu0 0.0
    %686 = vmatpush1.msra.mxu0 0.0
    %687 = vmatprep.subr.mxu0 0.0
    %688 = vmatpush1.msra.mxu0 0.0
    %689 = vmatprep.subr.mxu0 0.0
    %690 = vmatpush1.msra.mxu0 0.0
    %691 = vmatprep.subr.mxu0 0.0
    %692 = vmatpush1.msra.mxu0 0.0
    %693 = vmatprep.subr.mxu0 0.0
    %694 = vmatpush1.msra.mxu0 0.0
    %695 = vmatprep.subr.mxu0 0.0
    %696 = vmatpush1.msra.mxu0 0.0
    %697 = vmatprep.subr.mxu0 0.0
    %698 = vmatpush1.msra.mxu0 0.0
    %699 = vmatprep.subr.mxu0 0.0
    %700 = vmatpush1.msra.mxu0 0.0
    %701 = vmatprep.subr.mxu0 0.0
    %702 = vmatpush1.msra.mxu0 0.0
    %703 = vmatprep.subr.mxu0 0.0
    %704 = vmatpush1.msra.mxu0 0.0
    %705 = vmatprep.mubr.f32.mxu0 0.0
    %v706 = vand.u32 %v635, 4294901760
    %v707 = vsub.f32 %v635, %v706
    %v708 = vand.u32 %v707, 4294901760
    %v709 = vsub.f32 %v707, %v708
    %v710 = vand.u32 %v709, 4294901760
    %711 = vmatmul.mubr.f32.gmra.mrb[0].mxu0 %v710
    %v712 = vpop.f32.mrb[0].mxu0
    %v713 = vadd.f32 %v631, %v712
    %v714 = vpop.f32.mrb[0].mxu0
    %715 = vdwg.mxu0
    %716 = vmatprep.subr.mxu0 0.0
    %v717 = vand.u32 %v622, 4294901760
    %v718 = vsub.f32 %v622, %v717
    %v719 = vand.u32 %v718, 4294901760
    %v720 = vsub.f32 %v718, %v719
    %v721 = vand.u32 %v720, 4294901760
    %722 = vmatpush1.msra.mxu0 %v721
    %723 = vmatprep.subr.mxu0 0.0
    %v724 = vand.u32 %v623, 4294901760
    %v725 = vsub.f32 %v623, %v724
    %v726 = vand.u32 %v725, 4294901760
    %v727 = vsub.f32 %v725, %v726
    %v728 = vand.u32 %v727, 4294901760
    %729 = vmatpush1.msra.mxu0 %v728
    %730 = vmatprep.subr.mxu0 0.0
    %v731 = vand.u32 %v624, 4294901760
    %v732 = vsub.f32 %v624, %v731
    %v733 = vand.u32 %v732, 4294901760
    %v734 = vsub.f32 %v732, %v733
    %v735 = vand.u32 %v734, 4294901760
    %736 = vmatpush1.msra.mxu0 %v735
    %737 = vmatprep.subr.mxu0 0.0
    %v738 = vand.u32 %v625, 4294901760
    %v739 = vsub.f32 %v625, %v738
    %v740 = vand.u32 %v739, 4294901760
    %v741 = vsub.f32 %v739, %v740
    %v742 = vand.u32 %v741, 4294901760
    %743 = vmatpush1.msra.mxu0 %v742
    %744 = vmatprep.subr.mxu0 0.0
    %745 = vmatpush1.msra.mxu0 0.0
    %746 = vmatprep.subr.mxu0 0.0
    %747 = vmatpush1.msra.mxu0 0.0
    %748 = vmatprep.subr.mxu0 0.0
    %749 = vmatpush1.msra.mxu0 0.0
    %750 = vmatprep.subr.mxu0 0.0
    %751 = vmatpush1.msra.mxu0 0.0
    %752 = vmatprep.subr.mxu0 0.0
    %753 = vmatpush1.msra.mxu0 0.0
    %754 = vmatprep.subr.mxu0 0.0
    %755 = vmatpush1.msra.mxu0 0.0
    %756 = vmatprep.subr.mxu0 0.0
    %757 = vmatpush1.msra.mxu0 0.0
    %758 = vmatprep.subr.mxu0 0.0
    %759 = vmatpush1.msra.mxu0 0.0
    %760 = vmatprep.subr.mxu0 0.0
    %761 = vmatpush1.msra.mxu0 0.0
    %762 = vmatprep.subr.mxu0 0.0
    %763 = vmatpush1.msra.mxu0 0.0
    %764 = vmatprep.subr.mxu0 0.0
    %765 = vmatpush1.msra.mxu0 0.0
    %766 = vmatprep.subr.mxu0 0.0
    %767 = vmatpush1.msra.mxu0 0.0
    %768 = vmatprep.subr.mxu0 0.0
    %769 = vmatpush1.msra.mxu0 0.0
    %770 = vmatprep.subr.mxu0 0.0
    %771 = vmatpush1.msra.mxu0 0.0
    %772 = vmatprep.subr.mxu0 0.0
    %773 = vmatpush1.msra.mxu0 0.0
    %774 = vmatprep.subr.mxu0 0.0
    %775 = vmatpush1.msra.mxu0 0.0
    %776 = vmatprep.subr.mxu0 0.0
    %777 = vmatpush1.msra.mxu0 0.0
    %778 = vmatprep.subr.mxu0 0.0
    %779 = vmatpush1.msra.mxu0 0.0
    %780 = vmatprep.subr.mxu0 0.0
    %781 = vmatpush1.msra.mxu0 0.0
    %782 = vmatprep.subr.mxu0 0.0
    %783 = vmatpush1.msra.mxu0 0.0
    %784 = vmatprep.subr.mxu0 0.0
    %785 = vmatpush1.msra.mxu0 0.0
    %786 = vmatprep.subr.mxu0 0.0
    %787 = vmatpush1.msra.mxu0 0.0
    %788 = vmatprep.subr.mxu0 0.0
    %789 = vmatpush1.msra.mxu0 0.0
    %790 = vmatprep.subr.mxu0 0.0
    %791 = vmatpush1.msra.mxu0 0.0
    %792 = vmatprep.subr.mxu0 0.0
    %793 = vmatpush1.msra.mxu0 0.0
    %794 = vmatprep.subr.mxu0 0.0
    %795 = vmatpush1.msra.mxu0 0.0
    %796 = vmatprep.subr.mxu0 0.0
    %797 = vmatpush1.msra.mxu0 0.0
    %798 = vmatprep.subr.mxu0 0.0
    %799 = vmatpush1.msra.mxu0 0.0
    %800 = vmatprep.mubr.f32.mxu0 0.0
    %v801 = vand.u32 %v635, 4294901760
    %802 = vmatmul.mubr.f32.gmra.mrb[0].mxu0 %v801
    %v803 = vpop.f32.mrb[0].mxu0
    %v804 = vadd.f32 %v713, %v803
    %v805 = vpop.f32.mrb[0].mxu0
    %806 = vdwg.mxu0
    %807 = vmatprep.subr.mxu0 0.0
    %v808 = vand.u32 %v622, 4294901760
    %v809 = vsub.f32 %v622, %v808
    %810 = vmatpush1.msra.mxu0 %v809
    %811 = vmatprep.subr.mxu0 0.0
    %v812 = vand.u32 %v623, 4294901760
    %v813 = vsub.f32 %v623, %v812
    %814 = vmatpush1.msra.mxu0 %v813
    %815 = vmatprep.subr.mxu0 0.0
    %v816 = vand.u32 %v624, 4294901760
    %v817 = vsub.f32 %v624, %v816
    %818 = vmatpush1.msra.mxu0 %v817
    %819 = vmatprep.subr.mxu0 0.0
    %v820 = vand.u32 %v625, 4294901760
    %v821 = vsub.f32 %v625, %v820
    %822 = vmatpush1.msra.mxu0 %v821
    %823 = vmatprep.subr.mxu0 0.0
    %824 = vmatpush1.msra.mxu0 0.0
    %825 = vmatprep.subr.mxu0 0.0
    %826 = vmatpush1.msra.mxu0 0.0
    %827 = vmatprep.subr.mxu0 0.0
    %828 = vmatpush1.msra.mxu0 0.0
    %829 = vmatprep.subr.mxu0 0.0
    %830 = vmatpush1.msra.mxu0 0.0
    %831 = vmatprep.subr.mxu0 0.0
    %832 = vmatpush1.msra.mxu0 0.0
    %833 = vmatprep.subr.mxu0 0.0
    %834 = vmatpush1.msra.mxu0 0.0
    %835 = vmatprep.subr.mxu0 0.0
    %836 = vmatpush1.msra.mxu0 0.0
    %837 = vmatprep.subr.mxu0 0.0
    %838 = vmatpush1.msra.mxu0 0.0
    %839 = vmatprep.subr.mxu0 0.0
    %840 = vmatpush1.msra.mxu0 0.0
    %841 = vmatprep.subr.mxu0 0.0
    %842 = vmatpush1.msra.mxu0 0.0
    %843 = vmatprep.subr.mxu0 0.0
    %844 = vmatpush1.msra.mxu0 0.0
    %845 = vmatprep.subr.mxu0 0.0
    %846 = vmatpush1.msra.mxu0 0.0
    %847 = vmatprep.subr.mxu0 0.0
    %848 = vmatpush1.msra.mxu0 0.0
    %849 = vmatprep.subr.mxu0 0.0
    %850 = vmatpush1.msra.mxu0 0.0
    %851 = vmatprep.subr.mxu0 0.0
    %852 = vmatpush1.msra.mxu0 0.0
    %853 = vmatprep.subr.mxu0 0.0
    %854 = vmatpush1.msra.mxu0 0.0
    %855 = vmatprep.subr.mxu0 0.0
    %856 = vmatpush1.msra.mxu0 0.0
    %857 = vmatprep.subr.mxu0 0.0
    %858 = vmatpush1.msra.mxu0 0.0
    %859 = vmatprep.subr.mxu0 0.0
    %860 = vmatpush1.msra.mxu0 0.0
    %861 = vmatprep.subr.mxu0 0.0
    %862 = vmatpush1.msra.mxu0 0.0
    %863 = vmatprep.subr.mxu0 0.0
    %864 = vmatpush1.msra.mxu0 0.0
    %865 = vmatprep.subr.mxu0 0.0
    %866 = vmatpush1.msra.mxu0 0.0
    %867 = vmatprep.subr.mxu0 0.0
    %868 = vmatpush1.msra.mxu0 0.0
    %869 = vmatprep.subr.mxu0 0.0
    %870 = vmatpush1.msra.mxu0 0.0
    %871 = vmatprep.subr.mxu0 0.0
    %872 = vmatpush1.msra.mxu0 0.0
    %873 = vmatprep.subr.mxu0 0.0
    %874 = vmatpush1.msra.mxu0 0.0
    %875 = vmatprep.subr.mxu0 0.0
    %876 = vmatpush1.msra.mxu0 0.0
    %877 = vmatprep.subr.mxu0 0.0
    %878 = vmatpush1.msra.mxu0 0.0
    %879 = vmatprep.mubr.f32.mxu0 0.0
    %v880 = vand.u32 %v635, 4294901760
    %v881 = vsub.f32 %v635, %v880
    %882 = vmatmul.mubr.f32.gmra.mrb[0].mxu0 %v881
    %v883 = vpop.f32.mrb[0].mxu0
    %v884 = vadd.f32 %v804, %v883
    %v885 = vpop.f32.mrb[0].mxu0
    %886 = vdwg.mxu0
    %887 = vmatprep.subr.mxu0 0.0
    %v888 = vand.u32 %v622, 4294901760
    %889 = vmatpush1.msra.mxu0 %v888
    %890 = vmatprep.subr.mxu0 0.0
    %v891 = vand.u32 %v623, 4294901760
    %892 = vmatpush1.msra.mxu0 %v891
    %893 = vmatprep.subr.mxu0 0.0
    %v894 = vand.u32 %v624, 4294901760
    %895 = vmatpush1.msra.mxu0 %v894
    %896 = vmatprep.subr.mxu0 0.0
    %v897 = vand.u32 %v625, 4294901760
    %898 = vmatpush1.msra.mxu0 %v897
    %899 = vmatprep.subr.mxu0 0.0
    %900 = vmatpush1.msra.mxu0 0.0
    %901 = vmatprep.subr.mxu0 0.0
    %902 = vmatpush1.msra.mxu0 0.0
    %903 = vmatprep.subr.mxu0 0.0
    %904 = vmatpush1.msra.mxu0 0.0
    %905 = vmatprep.subr.mxu0 0.0
    %906 = vmatpush1.msra.mxu0 0.0
    %907 = vmatprep.subr.mxu0 0.0
    %908 = vmatpush1.msra.mxu0 0.0
    %909 = vmatprep.subr.mxu0 0.0
    %910 = vmatpush1.msra.mxu0 0.0
    %911 = vmatprep.subr.mxu0 0.0
    %912 = vmatpush1.msra.mxu0 0.0
    %913 = vmatprep.subr.mxu0 0.0
    %914 = vmatpush1.msra.mxu0 0.0
    %915 = vmatprep.subr.mxu0 0.0
    %916 = vmatpush1.msra.mxu0 0.0
    %917 = vmatprep.subr.mxu0 0.0
    %918 = vmatpush1.msra.mxu0 0.0
    %919 = vmatprep.subr.mxu0 0.0
    %920 = vmatpush1.msra.mxu0 0.0
    %921 = vmatprep.subr.mxu0 0.0
    %922 = vmatpush1.msra.mxu0 0.0
    %923 = vmatprep.subr.mxu0 0.0
    %924 = vmatpush1.msra.mxu0 0.0
    %925 = vmatprep.subr.mxu0 0.0
    %926 = vmatpush1.msra.mxu0 0.0
    %927 = vmatprep.subr.mxu0 0.0
    %928 = vmatpush1.msra.mxu0 0.0
    %929 = vmatprep.subr.mxu0 0.0
    %930 = vmatpush1.msra.mxu0 0.0
    %931 = vmatprep.subr.mxu0 0.0
    %932 = vmatpush1.msra.mxu0 0.0
    %933 = vmatprep.subr.mxu0 0.0
    %934 = vmatpush1.msra.mxu0 0.0
    %935 = vmatprep.subr.mxu0 0.0
    %936 = vmatpush1.msra.mxu0 0.0
    %937 = vmatprep.subr.mxu0 0.0
    %938 = vmatpush1.msra.mxu0 0.0
    %939 = vmatprep.subr.mxu0 0.0
    %940 = vmatpush1.msra.mxu0 0.0
    %941 = vmatprep.subr.mxu0 0.0
    %942 = vmatpush1.msra.mxu0 0.0
    %943 = vmatprep.subr.mxu0 0.0
    %944 = vmatpush1.msra.mxu0 0.0
    %945 = vmatprep.subr.mxu0 0.0
    %946 = vmatpush1.msra.mxu0 0.0
    %947 = vmatprep.subr.mxu0 0.0
    %948 = vmatpush1.msra.mxu0 0.0
    %949 = vmatprep.subr.mxu0 0.0
    %950 = vmatpush1.msra.mxu0 0.0
    %951 = vmatprep.subr.mxu0 0.0
    %952 = vmatpush1.msra.mxu0 0.0
    %953 = vmatprep.subr.mxu0 0.0
    %954 = vmatpush1.msra.mxu0 0.0
    %955 = vmatprep.mubr.f32.mxu0 0.0
    %v956 = vand.u32 %v635, 4294901760
    %v957 = vsub.f32 %v635, %v956
    %v958 = vand.u32 %v957, 4294901760
    %959 = vmatmul.mubr.f32.gmra.mrb[0].mxu0 %v958
    %v960 = vpop.f32.mrb[0].mxu0
    %v961 = vadd.f32 %v884, %v960
    %v962 = vpop.f32.mrb[0].mxu0
    %963 = vdwg.mxu0
    %964 = vmatprep.subr.mxu0 0.0
    %v965 = vand.u32 %v622, 4294901760
    %v966 = vsub.f32 %v622, %v965
    %v967 = vand.u32 %v966, 4294901760
    %968 = vmatpush1.msra.mxu0 %v967
    %969 = vmatprep.subr.mxu0 0.0
    %v970 = vand.u32 %v623, 4294901760
    %v971 = vsub.f32 %v623, %v970
    %v972 = vand.u32 %v971, 4294901760
    %973 = vmatpush1.msra.mxu0 %v972
    %974 = vmatprep.subr.mxu0 0.0
    %v975 = vand.u32 %v624, 4294901760
    %v976 = vsub.f32 %v624, %v975
    %v977 = vand.u32 %v976, 4294901760
    %978 = vmatpush1.msra.mxu0 %v977
    %979 = vmatprep.subr.mxu0 0.0
    %v980 = vand.u32 %v625, 4294901760
    %v981 = vsub.f32 %v625, %v980
    %v982 = vand.u32 %v981, 4294901760
    %983 = vmatpush1.msra.mxu0 %v982
    %984 = vmatprep.subr.mxu0 0.0
    %985 = vmatpush1.msra.mxu0 0.0
    %986 = vmatprep.subr.mxu0 0.0
    %987 = vmatpush1.msra.mxu0 0.0
    %988 = vmatprep.subr.mxu0 0.0
    %989 = vmatpush1.msra.mxu0 0.0
    %990 = vmatprep.subr.mxu0 0.0
    %991 = vmatpush1.msra.mxu0 0.0
    %992 = vmatprep.subr.mxu0 0.0
    %993 = vmatpush1.msra.mxu0 0.0
    %994 = vmatprep.subr.mxu0 0.0
    %995 = vmatpush1.msra.mxu0 0.0
    %996 = vmatprep.subr.mxu0 0.0
    %997 = vmatpush1.msra.mxu0 0.0
    %998 = vmatprep.subr.mxu0 0.0
    %999 = vmatpush1.msra.mxu0 0.0
    %1000 = vmatprep.subr.mxu0 0.0
    %1001 = vmatpush1.msra.mxu0 0.0
    %1002 = vmatprep.subr.mxu0 0.0
    %1003 = vmatpush1.msra.mxu0 0.0
    %1004 = vmatprep.subr.mxu0 0.0
    %1005 = vmatpush1.msra.mxu0 0.0
    %1006 = vmatprep.subr.mxu0 0.0
    %1007 = vmatpush1.msra.mxu0 0.0
    %1008 = vmatprep.subr.mxu0 0.0
    %1009 = vmatpush1.msra.mxu0 0.0
    %1010 = vmatprep.subr.mxu0 0.0
    %1011 = vmatpush1.msra.mxu0 0.0
    %1012 = vmatprep.subr.mxu0 0.0
    %1013 = vmatpush1.msra.mxu0 0.0
    %1014 = vmatprep.subr.mxu0 0.0
    %1015 = vmatpush1.msra.mxu0 0.0
    %1016 = vmatprep.subr.mxu0 0.0
    %1017 = vmatpush1.msra.mxu0 0.0
    %1018 = vmatprep.subr.mxu0 0.0
    %1019 = vmatpush1.msra.mxu0 0.0
    %1020 = vmatprep.subr.mxu0 0.0
    %1021 = vmatpush1.msra.mxu0 0.0
    %1022 = vmatprep.subr.mxu0 0.0
    %1023 = vmatpush1.msra.mxu0 0.0
    %1024 = vmatprep.subr.mxu0 0.0
    %1025 = vmatpush1.msra.mxu0 0.0
    %1026 = vmatprep.subr.mxu0 0.0
    %1027 = vmatpush1.msra.mxu0 0.0
    %1028 = vmatprep.subr.mxu0 0.0
    %1029 = vmatpush1.msra.mxu0 0.0
    %1030 = vmatprep.subr.mxu0 0.0
    %1031 = vmatpush1.msra.mxu0 0.0
    %1032 = vmatprep.subr.mxu0 0.0
    %1033 = vmatpush1.msra.mxu0 0.0
    %1034 = vmatprep.subr.mxu0 0.0
    %1035 = vmatpush1.msra.mxu0 0.0
    %1036 = vmatprep.subr.mxu0 0.0
    %1037 = vmatpush1.msra.mxu0 0.0
    %1038 = vmatprep.subr.mxu0 0.0
    %1039 = vmatpush1.msra.mxu0 0.0
    %1040 = vmatprep.mubr.f32.mxu0 0.0
    %v1041 = vand.u32 %v635, 4294901760
    %1042 = vmatmul.mubr.f32.gmra.mrb[0].mxu0 %v1041
    %v1043 = vpop.f32.mrb[0].mxu0
    %v1044 = vadd.f32 %v961, %v1043
    %v1045 = vpop.f32.mrb[0].mxu0
    %1046 = vdwg.mxu0
    %1047 = vmatprep.subr.mxu0 0.0
    %v1048 = vand.u32 %v622, 4294901760
    %1049 = vmatpush1.msra.mxu0 %v1048
    %1050 = vmatprep.subr.mxu0 0.0
    %v1051 = vand.u32 %v623, 4294901760
    %1052 = vmatpush1.msra.mxu0 %v1051
    %1053 = vmatprep.subr.mxu0 0.0
    %v1054 = vand.u32 %v624, 4294901760
    %1055 = vmatpush1.msra.mxu0 %v1054
    %1056 = vmatprep.subr.mxu0 0.0
    %v1057 = vand.u32 %v625, 4294901760
    %1058 = vmatpush1.msra.mxu0 %v1057
    %1059 = vmatprep.subr.mxu0 0.0
    %1060 = vmatpush1.msra.mxu0 0.0
    %1061 = vmatprep.subr.mxu0 0.0
    %1062 = vmatpush1.msra.mxu0 0.0
    %1063 = vmatprep.subr.mxu0 0.0
    %1064 = vmatpush1.msra.mxu0 0.0
    %1065 = vmatprep.subr.mxu0 0.0
    %1066 = vmatpush1.msra.mxu0 0.0
    %1067 = vmatprep.subr.mxu0 0.0
    %1068 = vmatpush1.msra.mxu0 0.0
    %1069 = vmatprep.subr.mxu0 0.0
    %1070 = vmatpush1.msra.mxu0 0.0
    %1071 = vmatprep.subr.mxu0 0.0
    %1072 = vmatpush1.msra.mxu0 0.0
    %1073 = vmatprep.subr.mxu0 0.0
    %1074 = vmatpush1.msra.mxu0 0.0
    %1075 = vmatprep.subr.mxu0 0.0
    %1076 = vmatpush1.msra.mxu0 0.0
    %1077 = vmatprep.subr.mxu0 0.0
    %1078 = vmatpush1.msra.mxu0 0.0
    %1079 = vmatprep.subr.mxu0 0.0
    %1080 = vmatpush1.msra.mxu0 0.0
    %1081 = vmatprep.subr.mxu0 0.0
    %1082 = vmatpush1.msra.mxu0 0.0
    %1083 = vmatprep.subr.mxu0 0.0
    %1084 = vmatpush1.msra.mxu0 0.0
    %1085 = vmatprep.subr.mxu0 0.0
    %1086 = vmatpush1.msra.mxu0 0.0
    %1087 = vmatprep.subr.mxu0 0.0
    %1088 = vmatpush1.msra.mxu0 0.0
    %1089 = vmatprep.subr.mxu0 0.0
    %1090 = vmatpush1.msra.mxu0 0.0
    %1091 = vmatprep.subr.mxu0 0.0
    %1092 = vmatpush1.msra.mxu0 0.0
    %1093 = vmatprep.subr.mxu0 0.0
    %1094 = vmatpush1.msra.mxu0 0.0
    %1095 = vmatprep.subr.mxu0 0.0
    %1096 = vmatpush1.msra.mxu0 0.0
    %1097 = vmatprep.subr.mxu0 0.0
    %1098 = vmatpush1.msra.mxu0 0.0
    %1099 = vmatprep.subr.mxu0 0.0
    %1100 = vmatpush1.msra.mxu0 0.0
    %1101 = vmatprep.subr.mxu0 0.0
    %1102 = vmatpush1.msra.mxu0 0.0
    %1103 = vmatprep.subr.mxu0 0.0
    %1104 = vmatpush1.msra.mxu0 0.0
    %1105 = vmatprep.subr.mxu0 0.0
    %1106 = vmatpush1.msra.mxu0 0.0
    %1107 = vmatprep.subr.mxu0 0.0
    %1108 = vmatpush1.msra.mxu0 0.0
    %1109 = vmatprep.subr.mxu0 0.0
    %1110 = vmatpush1.msra.mxu0 0.0
    %1111 = vmatprep.subr.mxu0 0.0
    %1112 = vmatpush1.msra.mxu0 0.0
    %1113 = vmatprep.subr.mxu0 0.0
    %1114 = vmatpush1.msra.mxu0 0.0
    %1115 = vmatprep.mubr.f32.mxu0 0.0
    %v1116 = vand.u32 %v635, 4294901760
    %1117 = vmatmul.mubr.f32.gmra.mrb[0].mxu0 %v1116
    %v1118 = vpop.f32.mrb[0].mxu0
    %v1119 = vadd.f32 %v1044, %v1118
    %v1120 = vpop.f32.mrb[0].mxu0
    %1121 = vdwg.mxu0
    %v1122 = vtanh.pop %v1119
    %v1123 = vld [vmem:[%s7] sm:$0xff]
    %v1124 = vld [vmem:[%s7 + $0x8] sm:$0xff]
    %v1125 = vld [vmem:[%s7 + $0x10] sm:$0xff]
    %v1126 = vld [vmem:[%s7 + $0x18] sm:$0xff]
    %v1127 = vld [vmem:[%s8] sm:$0x1]
    %v1129 = vlaneseq
    %v1130 = vshrl.u32 %v1129, 7
    %v1131 = vsub.s32 0, %v1130
    %v1132 = vrot.slane %v1127, %v1131
    %v1135 = vsel %vm633, %v1122, 0
    %1137 = vmatprep.subr.mxu0 0.0
    %v1138 = vand.u32 %v1123, 4294901760
    %1139 = vmatpush1.msra.mxu0 %v1138
    %1140 = vmatprep.subr.mxu0 0.0
    %v1141 = vand.u32 %v1124, 4294901760
    %1142 = vmatpush1.msra.mxu0 %v1141
    %1143 = vmatprep.subr.mxu0 0.0
    %v1144 = vand.u32 %v1125, 4294901760
    %1145 = vmatpush1.msra.mxu0 %v1144
    %1146 = vmatprep.subr.mxu0 0.0
    %v1147 = vand.u32 %v1126, 4294901760
    %1148 = vmatpush1.msra.mxu0 %v1147
    %1149 = vmatprep.subr.mxu0 0.0
    %1150 = vmatpush1.msra.mxu0 0.0
    %1151 = vmatprep.subr.mxu0 0.0
    %1152 = vmatpush1.msra.mxu0 0.0
    %1153 = vmatprep.subr.mxu0 0.0
    %1154 = vmatpush1.msra.mxu0 0.0
    %1155 = vmatprep.subr.mxu0 0.0
    %1156 = vmatpush1.msra.mxu0 0.0
    %1157 = vmatprep.subr.mxu0 0.0
    %1158 = vmatpush1.msra.mxu0 0.0
    %1159 = vmatprep.subr.mxu0 0.0
    %1160 = vmatpush1.msra.mxu0 0.0
    %1161 = vmatprep.subr.mxu0 0.0
    %1162 = vmatpush1.msra.mxu0 0.0
    %1163 = vmatprep.subr.mxu0 0.0
    %1164 = vmatpush1.msra.mxu0 0.0
    %1165 = vmatprep.subr.mxu0 0.0
    %1166 = vmatpush1.msra.mxu0 0.0
    %1167 = vmatprep.subr.mxu0 0.0
    %1168 = vmatpush1.msra.mxu0 0.0
    %1169 = vmatprep.subr.mxu0 0.0
    %1170 = vmatpush1.msra.mxu0 0.0
    %1171 = vmatprep.subr.mxu0 0.0
    %1172 = vmatpush1.msra.mxu0 0.0
    %1173 = vmatprep.subr.mxu0 0.0
    %1174 = vmatpush1.msra.mxu0 0.0
    %1175 = vmatprep.subr.mxu0 0.0
    %1176 = vmatpush1.msra.mxu0 0.0
    %1177 = vmatprep.subr.mxu0 0.0
    %1178 = vmatpush1.msra.mxu0 0.0
    %1179 = vmatprep.subr.mxu0 0.0
    %1180 = vmatpush1.msra.mxu0 0.0
    %1181 = vmatprep.subr.mxu0 0.0
    %1182 = vmatpush1.msra.mxu0 0.0
    %1183 = vmatprep.subr.mxu0 0.0
    %1184 = vmatpush1.msra.mxu0 0.0
    %1185 = vmatprep.subr.mxu0 0.0
    %1186 = vmatpush1.msra.mxu0 0.0
    %1187 = vmatprep.subr.mxu0 0.0
    %1188 = vmatpush1.msra.mxu0 0.0
    %1189 = vmatprep.subr.mxu0 0.0
    %1190 = vmatpush1.msra.mxu0 0.0
    %1191 = vmatprep.subr.mxu0 0.0
    %1192 = vmatpush1.msra.mxu0 0.0
    %1193 = vmatprep.subr.mxu0 0.0
    %1194 = vmatpush1.msra.mxu0 0.0
    %1195 = vmatprep.subr.mxu0 0.0
    %1196 = vmatpush1.msra.mxu0 0.0
    %1197 = vmatprep.subr.mxu0 0.0
    %1198 = vmatpush1.msra.mxu0 0.0
    %1199 = vmatprep.subr.mxu0 0.0
    %1200 = vmatpush1.msra.mxu0 0.0
    %1201 = vmatprep.subr.mxu0 0.0
    %1202 = vmatpush1.msra.mxu0 0.0
    %1203 = vmatprep.subr.mxu0 0.0
    %1204 = vmatpush1.msra.mxu0 0.0
    %1205 = vmatprep.mubr.f32.mxu0 0.0
    %v1206 = vand.u32 %v1135, 4294901760
    %v1207 = vsub.f32 %v1135, %v1206
    %v1208 = vand.u32 %v1207, 4294901760
    %v1209 = vsub.f32 %v1207, %v1208
    %v1210 = vand.u32 %v1209, 4294901760
    %1211 = vmatmul.mubr.f32.gmra.mrb[0].mxu0 %v1210
    %v1212 = vpop.f32.mrb[0].mxu0
    %v1213 = vadd.f32 %v1132, %v1212
    %v1214 = vpop.f32.mrb[0].mxu0
    %1215 = vdwg.mxu0
    %1216 = vmatprep.subr.mxu0 0.0
    %v1217 = vand.u32 %v1123, 4294901760
    %v1218 = vsub.f32 %v1123, %v1217
    %v1219 = vand.u32 %v1218, 4294901760
    %v1220 = vsub.f32 %v1218, %v1219
    %v1221 = vand.u32 %v1220, 4294901760
    %1222 = vmatpush1.msra.mxu0 %v1221
    %1223 = vmatprep.subr.mxu0 0.0
    %v1224 = vand.u32 %v1124, 4294901760
    %v1225 = vsub.f32 %v1124, %v1224
    %v1226 = vand.u32 %v1225, 4294901760
    %v1227 = vsub.f32 %v1225, %v1226
    %v1228 = vand.u32 %v1227, 4294901760
    %1229 = vmatpush1.msra.mxu0 %v1228
    %1230 = vmatprep.subr.mxu0 0.0
    %v1231 = vand.u32 %v1125, 4294901760
    %v1232 = vsub.f32 %v1125, %v1231
    %v1233 = vand.u32 %v1232, 4294901760
    %v1234 = vsub.f32 %v1232, %v1233
    %v1235 = vand.u32 %v1234, 4294901760
    %1236 = vmatpush1.msra.mxu0 %v1235
    %1237 = vmatprep.subr.mxu0 0.0
    %v1238 = vand.u32 %v1126, 4294901760
    %v1239 = vsub.f32 %v1126, %v1238
    %v1240 = vand.u32 %v1239, 4294901760
    %v1241 = vsub.f32 %v1239, %v1240
    %v1242 = vand.u32 %v1241, 4294901760
    %1243 = vmatpush1.msra.mxu0 %v1242
    %1244 = vmatprep.subr.mxu0 0.0
    %1245 = vmatpush1.msra.mxu0 0.0
    %1246 = vmatprep.subr.mxu0 0.0
    %1247 = vmatpush1.msra.mxu0 0.0
    %1248 = vmatprep.subr.mxu0 0.0
    %1249 = vmatpush1.msra.mxu0 0.0
    %1250 = vmatprep.subr.mxu0 0.0
    %1251 = vmatpush1.msra.mxu0 0.0
    %1252 = vmatprep.subr.mxu0 0.0
    %1253 = vmatpush1.msra.mxu0 0.0
    %1254 = vmatprep.subr.mxu0 0.0
    %1255 = vmatpush1.msra.mxu0 0.0
    %1256 = vmatprep.subr.mxu0 0.0
    %1257 = vmatpush1.msra.mxu0 0.0
    %1258 = vmatprep.subr.mxu0 0.0
    %1259 = vmatpush1.msra.mxu0 0.0
    %1260 = vmatprep.subr.mxu0 0.0
    %1261 = vmatpush1.msra.mxu0 0.0
    %1262 = vmatprep.subr.mxu0 0.0
    %1263 = vmatpush1.msra.mxu0 0.0
    %1264 = vmatprep.subr.mxu0 0.0
    %1265 = vmatpush1.msra.mxu0 0.0
    %1266 = vmatprep.subr.mxu0 0.0
    %1267 = vmatpush1.msra.mxu0 0.0
    %1268 = vmatprep.subr.mxu0 0.0
    %1269 = vmatpush1.msra.mxu0 0.0
    %1270 = vmatprep.subr.mxu0 0.0
    %1271 = vmatpush1.msra.mxu0 0.0
    %1272 = vmatprep.subr.mxu0 0.0
    %1273 = vmatpush1.msra.mxu0 0.0
    %1274 = vmatprep.subr.mxu0 0.0
    %1275 = vmatpush1.msra.mxu0 0.0
    %1276 = vmatprep.subr.mxu0 0.0
    %1277 = vmatpush1.msra.mxu0 0.0
    %1278 = vmatprep.subr.mxu0 0.0
    %1279 = vmatpush1.msra.mxu0 0.0
    %1280 = vmatprep.subr.mxu0 0.0
    %1281 = vmatpush1.msra.mxu0 0.0
    %1282 = vmatprep.subr.mxu0 0.0
    %1283 = vmatpush1.msra.mxu0 0.0
    %1284 = vmatprep.subr.mxu0 0.0
    %1285 = vmatpush1.msra.mxu0 0.0
    %1286 = vmatprep.subr.mxu0 0.0
    %1287 = vmatpush1.msra.mxu0 0.0
    %1288 = vmatprep.subr.mxu0 0.0
    %1289 = vmatpush1.msra.mxu0 0.0
    %1290 = vmatprep.subr.mxu0 0.0
    %1291 = vmatpush1.msra.mxu0 0.0
    %1292 = vmatprep.subr.mxu0 0.0
    %1293 = vmatpush1.msra.mxu0 0.0
    %1294 = vmatprep.subr.mxu0 0.0
    %1295 = vmatpush1.msra.mxu0 0.0
    %1296 = vmatprep.subr.mxu0 0.0
    %1297 = vmatpush1.msra.mxu0 0.0
    %1298 = vmatprep.subr.mxu0 0.0
    %1299 = vmatpush1.msra.mxu0 0.0
    %1300 = vmatprep.mubr.f32.mxu0 0.0
    %v1301 = vand.u32 %v1135, 4294901760
    %1302 = vmatmul.mubr.f32.gmra.mrb[0].mxu0 %v1301
    %v1303 = vpop.f32.mrb[0].mxu0
    %v1304 = vadd.f32 %v1213, %v1303
    %v1305 = vpop.f32.mrb[0].mxu0
    %1306 = vdwg.mxu0
    %1307 = vmatprep.subr.mxu0 0.0
    %v1308 = vand.u32 %v1123, 4294901760
    %v1309 = vsub.f32 %v1123, %v1308
    %1310 = vmatpush1.msra.mxu0 %v1309
    %1311 = vmatprep.subr.mxu0 0.0
    %v1312 = vand.u32 %v1124, 4294901760
    %v1313 = vsub.f32 %v1124, %v1312
    %1314 = vmatpush1.msra.mxu0 %v1313
    %1315 = vmatprep.subr.mxu0 0.0
    %v1316 = vand.u32 %v1125, 4294901760
    %v1317 = vsub.f32 %v1125, %v1316
    %1318 = vmatpush1.msra.mxu0 %v1317
    %1319 = vmatprep.subr.mxu0 0.0
    %v1320 = vand.u32 %v1126, 4294901760
    %v1321 = vsub.f32 %v1126, %v1320
    %1322 = vmatpush1.msra.mxu0 %v1321
    %1323 = vmatprep.subr.mxu0 0.0
    %1324 = vmatpush1.msra.mxu0 0.0
    %1325 = vmatprep.subr.mxu0 0.0
    %1326 = vmatpush1.msra.mxu0 0.0
    %1327 = vmatprep.subr.mxu0 0.0
    %1328 = vmatpush1.msra.mxu0 0.0
    %1329 = vmatprep.subr.mxu0 0.0
    %1330 = vmatpush1.msra.mxu0 0.0
    %1331 = vmatprep.subr.mxu0 0.0
    %1332 = vmatpush1.msra.mxu0 0.0
    %1333 = vmatprep.subr.mxu0 0.0
    %1334 = vmatpush1.msra.mxu0 0.0
    %1335 = vmatprep.subr.mxu0 0.0
    %1336 = vmatpush1.msra.mxu0 0.0
    %1337 = vmatprep.subr.mxu0 0.0
    %1338 = vmatpush1.msra.mxu0 0.0
    %1339 = vmatprep.subr.mxu0 0.0
    %1340 = vmatpush1.msra.mxu0 0.0
    %1341 = vmatprep.subr.mxu0 0.0
    %1342 = vmatpush1.msra.mxu0 0.0
    %1343 = vmatprep.subr.mxu0 0.0
    %1344 = vmatpush1.msra.mxu0 0.0
    %1345 = vmatprep.subr.mxu0 0.0
    %1346 = vmatpush1.msra.mxu0 0.0
    %1347 = vmatprep.subr.mxu0 0.0
    %1348 = vmatpush1.msra.mxu0 0.0
    %1349 = vmatprep.subr.mxu0 0.0
    %1350 = vmatpush1.msra.mxu0 0.0
    %1351 = vmatprep.subr.mxu0 0.0
    %1352 = vmatpush1.msra.mxu0 0.0
    %1353 = vmatprep.subr.mxu0 0.0
    %1354 = vmatpush1.msra.mxu0 0.0
    %1355 = vmatprep.subr.mxu0 0.0
    %1356 = vmatpush1.msra.mxu0 0.0
    %1357 = vmatprep.subr.mxu0 0.0
    %1358 = vmatpush1.msra.mxu0 0.0
    %1359 = vmatprep.subr.mxu0 0.0
    %1360 = vmatpush1.msra.mxu0 0.0
    %1361 = vmatprep.subr.mxu0 0.0
    %1362 = vmatpush1.msra.mxu0 0.0
    %1363 = vmatprep.subr.mxu0 0.0
    %1364 = vmatpush1.msra.mxu0 0.0
    %1365 = vmatprep.subr.mxu0 0.0
    %1366 = vmatpush1.msra.mxu0 0.0
    %1367 = vmatprep.subr.mxu0 0.0
    %1368 = vmatpush1.msra.mxu0 0.0
    %1369 = vmatprep.subr.mxu0 0.0
    %1370 = vmatpush1.msra.mxu0 0.0
    %1371 = vmatprep.subr.mxu0 0.0
    %1372 = vmatpush1.msra.mxu0 0.0
    %1373 = vmatprep.subr.mxu0 0.0
    %1374 = vmatpush1.msra.mxu0 0.0
    %1375 = vmatprep.subr.mxu0 0.0
    %1376 = vmatpush1.msra.mxu0 0.0
    %1377 = vmatprep.subr.mxu0 0.0
    %1378 = vmatpush1.msra.mxu0 0.0
    %1379 = vmatprep.mubr.f32.mxu0 0.0
    %v1380 = vand.u32 %v1135, 4294901760
    %v1381 = vsub.f32 %v1135, %v1380
    %1382 = vmatmul.mubr.f32.gmra.mrb[0].mxu0 %v1381
    %v1383 = vpop.f32.mrb[0].mxu0
    %v1384 = vadd.f32 %v1304, %v1383
    %v1385 = vpop.f32.mrb[0].mxu0
    %1386 = vdwg.mxu0
    %1387 = vmatprep.subr.mxu0 0.0
    %v1388 = vand.u32 %v1123, 4294901760
    %1389 = vmatpush1.msra.mxu0 %v1388
    %1390 = vmatprep.subr.mxu0 0.0
    %v1391 = vand.u32 %v1124, 4294901760
    %1392 = vmatpush1.msra.mxu0 %v1391
    %1393 = vmatprep.subr.mxu0 0.0
    %v1394 = vand.u32 %v1125, 4294901760
    %1395 = vmatpush1.msra.mxu0 %v1394
    %1396 = vmatprep.subr.mxu0 0.0
    %v1397 = vand.u32 %v1126, 4294901760
    %1398 = vmatpush1.msra.mxu0 %v1397
    %1399 = vmatprep.subr.mxu0 0.0
    %1400 = vmatpush1.msra.mxu0 0.0
    %1401 = vmatprep.subr.mxu0 0.0
    %1402 = vmatpush1.msra.mxu0 0.0
    %1403 = vmatprep.subr.mxu0 0.0
    %1404 = vmatpush1.msra.mxu0 0.0
    %1405 = vmatprep.subr.mxu0 0.0
    %1406 = vmatpush1.msra.mxu0 0.0
    %1407 = vmatprep.subr.mxu0 0.0
    %1408 = vmatpush1.msra.mxu0 0.0
    %1409 = vmatprep.subr.mxu0 0.0
    %1410 = vmatpush1.msra.mxu0 0.0
    %1411 = vmatprep.subr.mxu0 0.0
    %1412 = vmatpush1.msra.mxu0 0.0
    %1413 = vmatprep.subr.mxu0 0.0
    %1414 = vmatpush1.msra.mxu0 0.0
    %1415 = vmatprep.subr.mxu0 0.0
    %1416 = vmatpush1.msra.mxu0 0.0
    %1417 = vmatprep.subr.mxu0 0.0
    %1418 = vmatpush1.msra.mxu0 0.0
    %1419 = vmatprep.subr.mxu0 0.0
    %1420 = vmatpush1.msra.mxu0 0.0
    %1421 = vmatprep.subr.mxu0 0.0
    %1422 = vmatpush1.msra.mxu0 0.0
    %1423 = vmatprep.subr.mxu0 0.0
    %1424 = vmatpush1.msra.mxu0 0.0
    %1425 = vmatprep.subr.mxu0 0.0
    %1426 = vmatpush1.msra.mxu0 0.0
    %1427 = vmatprep.subr.mxu0 0.0
    %1428 = vmatpush1.msra.mxu0 0.0
    %1429 = vmatprep.subr.mxu0 0.0
    %1430 = vmatpush1.msra.mxu0 0.0
    %1431 = vmatprep.subr.mxu0 0.0
    %1432 = vmatpush1.msra.mxu0 0.0
    %1433 = vmatprep.subr.mxu0 0.0
    %1434 = vmatpush1.msra.mxu0 0.0
    %1435 = vmatprep.subr.mxu0 0.0
    %1436 = vmatpush1.msra.mxu0 0.0
    %1437 = vmatprep.subr.mxu0 0.0
    %1438 = vmatpush1.msra.mxu0 0.0
    %1439 = vmatprep.subr.mxu0 0.0
    %1440 = vmatpush1.msra.mxu0 0.0
    %1441 = vmatprep.subr.mxu0 0.0
    %1442 = vmatpush1.msra.mxu0 0.0
    %1443 = vmatprep.subr.mxu0 0.0
    %1444 = vmatpush1.msra.mxu0 0.0
    %1445 = vmatprep.subr.mxu0 0.0
    %1446 = vmatpush1.msra.mxu0 0.0
    %1447 = vmatprep.subr.mxu0 0.0
    %1448 = vmatpush1.msra.mxu0 0.0
    %1449 = vmatprep.subr.mxu0 0.0
    %1450 = vmatpush1.msra.mxu0 0.0
    %1451 = vmatprep.subr.mxu0 0.0
    %1452 = vmatpush1.msra.mxu0 0.0
    %1453 = vmatprep.subr.mxu0 0.0
    %1454 = vmatpush1.msra.mxu0 0.0
    %1455 = vmatprep.mubr.f32.mxu0 0.0
    %v1456 = vand.u32 %v1135, 4294901760
    %v1457 = vsub.f32 %v1135, %v1456
    %v1458 = vand.u32 %v1457, 4294901760
    %1459 = vmatmul.mubr.f32.gmra.mrb[0].mxu0 %v1458
    %v1460 = vpop.f32.mrb[0].mxu0
    %v1461 = vadd.f32 %v1384, %v1460
    %v1462 = vpop.f32.mrb[0].mxu0
    %1463 = vdwg.mxu0
    %1464 = vmatprep.subr.mxu0 0.0
    %v1465 = vand.u32 %v1123, 4294901760
    %v1466 = vsub.f32 %v1123, %v1465
    %v1467 = vand.u32 %v1466, 4294901760
    %1468 = vmatpush1.msra.mxu0 %v1467
    %1469 = vmatprep.subr.mxu0 0.0
    %v1470 = vand.u32 %v1124, 4294901760
    %v1471 = vsub.f32 %v1124, %v1470
    %v1472 = vand.u32 %v1471, 4294901760
    %1473 = vmatpush1.msra.mxu0 %v1472
    %1474 = vmatprep.subr.mxu0 0.0
    %v1475 = vand.u32 %v1125, 4294901760
    %v1476 = vsub.f32 %v1125, %v1475
    %v1477 = vand.u32 %v1476, 4294901760
    %1478 = vmatpush1.msra.mxu0 %v1477
    %1479 = vmatprep.subr.mxu0 0.0
    %v1480 = vand.u32 %v1126, 4294901760
    %v1481 = vsub.f32 %v1126, %v1480
    %v1482 = vand.u32 %v1481, 4294901760
    %1483 = vmatpush1.msra.mxu0 %v1482
    %1484 = vmatprep.subr.mxu0 0.0
    %1485 = vmatpush1.msra.mxu0 0.0
    %1486 = vmatprep.subr.mxu0 0.0
    %1487 = vmatpush1.msra.mxu0 0.0
    %1488 = vmatprep.subr.mxu0 0.0
    %1489 = vmatpush1.msra.mxu0 0.0
    %1490 = vmatprep.subr.mxu0 0.0
    %1491 = vmatpush1.msra.mxu0 0.0
    %1492 = vmatprep.subr.mxu0 0.0
    %1493 = vmatpush1.msra.mxu0 0.0
    %1494 = vmatprep.subr.mxu0 0.0
    %1495 = vmatpush1.msra.mxu0 0.0
    %1496 = vmatprep.subr.mxu0 0.0
    %1497 = vmatpush1.msra.mxu0 0.0
    %1498 = vmatprep.subr.mxu0 0.0
    %1499 = vmatpush1.msra.mxu0 0.0
    %1500 = vmatprep.subr.mxu0 0.0
    %1501 = vmatpush1.msra.mxu0 0.0
    %1502 = vmatprep.subr.mxu0 0.0
    %1503 = vmatpush1.msra.mxu0 0.0
    %1504 = vmatprep.subr.mxu0 0.0
    %1505 = vmatpush1.msra.mxu0 0.0
    %1506 = vmatprep.subr.mxu0 0.0
    %1507 = vmatpush1.msra.mxu0 0.0
    %1508 = vmatprep.subr.mxu0 0.0
    %1509 = vmatpush1.msra.mxu0 0.0
    %1510 = vmatprep.subr.mxu0 0.0
    %1511 = vmatpush1.msra.mxu0 0.0
    %1512 = vmatprep.subr.mxu0 0.0
    %1513 = vmatpush1.msra.mxu0 0.0
    %1514 = vmatprep.subr.mxu0 0.0
    %1515 = vmatpush1.msra.mxu0 0.0
    %1516 = vmatprep.subr.mxu0 0.0
    %1517 = vmatpush1.msra.mxu0 0.0
    %1518 = vmatprep.subr.mxu0 0.0
    %1519 = vmatpush1.msra.mxu0 0.0
    %1520 = vmatprep.subr.mxu0 0.0
    %1521 = vmatpush1.msra.mxu0 0.0
    %1522 = vmatprep.subr.mxu0 0.0
    %1523 = vmatpush1.msra.mxu0 0.0
    %1524 = vmatprep.subr.mxu0 0.0
    %1525 = vmatpush1.msra.mxu0 0.0
    %1526 = vmatprep.subr.mxu0 0.0
    %1527 = vmatpush1.msra.mxu0 0.0
    %1528 = vmatprep.subr.mxu0 0.0
    %1529 = vmatpush1.msra.mxu0 0.0
    %1530 = vmatprep.subr.mxu0 0.0
    %1531 = vmatpush1.msra.mxu0 0.0
    %1532 = vmatprep.subr.mxu0 0.0
    %1533 = vmatpush1.msra.mxu0 0.0
    %1534 = vmatprep.subr.mxu0 0.0
    %1535 = vmatpush1.msra.mxu0 0.0
    %1536 = vmatprep.subr.mxu0 0.0
    %1537 = vmatpush1.msra.mxu0 0.0
    %1538 = vmatprep.subr.mxu0 0.0
    %1539 = vmatpush1.msra.mxu0 0.0
    %1540 = vmatprep.mubr.f32.mxu0 0.0
    %v1541 = vand.u32 %v1135, 4294901760
    %1542 = vmatmul.mubr.f32.gmra.mrb[0].mxu0 %v1541
    %v1543 = vpop.f32.mrb[0].mxu0
    %v1544 = vadd.f32 %v1461, %v1543
    %v1545 = vpop.f32.mrb[0].mxu0
    %1546 = vdwg.mxu0
    %1547 = vmatprep.subr.mxu0 0.0
    %v1548 = vand.u32 %v1123, 4294901760
    %1549 = vmatpush1.msra.mxu0 %v1548
    %1550 = vmatprep.subr.mxu0 0.0
    %v1551 = vand.u32 %v1124, 4294901760
    %1552 = vmatpush1.msra.mxu0 %v1551
    %1553 = vmatprep.subr.mxu0 0.0
    %v1554 = vand.u32 %v1125, 4294901760
    %1555 = vmatpush1.msra.mxu0 %v1554
    %1556 = vmatprep.subr.mxu0 0.0
    %v1557 = vand.u32 %v1126, 4294901760
    %1558 = vmatpush1.msra.mxu0 %v1557
    %1559 = vmatprep.subr.mxu0 0.0
    %1560 = vmatpush1.msra.mxu0 0.0
    %1561 = vmatprep.subr.mxu0 0.0
    %1562 = vmatpush1.msra.mxu0 0.0
    %1563 = vmatprep.subr.mxu0 0.0
    %1564 = vmatpush1.msra.mxu0 0.0
    %1565 = vmatprep.subr.mxu0 0.0
    %1566 = vmatpush1.msra.mxu0 0.0
    %1567 = vmatprep.subr.mxu0 0.0
    %1568 = vmatpush1.msra.mxu0 0.0
    %1569 = vmatprep.subr.mxu0 0.0
    %1570 = vmatpush1.msra.mxu0 0.0
    %1571 = vmatprep.subr.mxu0 0.0
    %1572 = vmatpush1.msra.mxu0 0.0
    %1573 = vmatprep.subr.mxu0 0.0
    %1574 = vmatpush1.msra.mxu0 0.0
    %1575 = vmatprep.subr.mxu0 0.0
    %1576 = vmatpush1.msra.mxu0 0.0
    %1577 = vmatprep.subr.mxu0 0.0
    %1578 = vmatpush1.msra.mxu0 0.0
    %1579 = vmatprep.subr.mxu0 0.0
    %1580 = vmatpush1.msra.mxu0 0.0
    %1581 = vmatprep.subr.mxu0 0.0
    %1582 = vmatpush1.msra.mxu0 0.0
    %1583 = vmatprep.subr.mxu0 0.0
    %1584 = vmatpush1.msra.mxu0 0.0
    %1585 = vmatprep.subr.mxu0 0.0
    %1586 = vmatpush1.msra.mxu0 0.0
    %1587 = vmatprep.subr.mxu0 0.0
    %1588 = vmatpush1.msra.mxu0 0.0
    %1589 = vmatprep.subr.mxu0 0.0
    %1590 = vmatpush1.msra.mxu0 0.0
    %1591 = vmatprep.subr.mxu0 0.0
    %1592 = vmatpush1.msra.mxu0 0.0
    %1593 = vmatprep.subr.mxu0 0.0
    %1594 = vmatpush1.msra.mxu0 0.0
    %1595 = vmatprep.subr.mxu0 0.0
    %1596 = vmatpush1.msra.mxu0 0.0
    %1597 = vmatprep.subr.mxu0 0.0
    %1598 = vmatpush1.msra.mxu0 0.0
    %1599 = vmatprep.subr.mxu0 0.0
    %1600 = vmatpush1.msra.mxu0 0.0
    %1601 = vmatprep.subr.mxu0 0.0
    %1602 = vmatpush1.msra.mxu0 0.0
    %1603 = vmatprep.subr.mxu0 0.0
    %1604 = vmatpush1.msra.mxu0 0.0
    %1605 = vmatprep.subr.mxu0 0.0
    %1606 = vmatpush1.msra.mxu0 0.0
    %1607 = vmatprep.subr.mxu0 0.0
    %1608 = vmatpush1.msra.mxu0 0.0
    %1609 = vmatprep.subr.mxu0 0.0
    %1610 = vmatpush1.msra.mxu0 0.0
    %1611 = vmatprep.subr.mxu0 0.0
    %1612 = vmatpush1.msra.mxu0 0.0
    %1613 = vmatprep.subr.mxu0 0.0
    %1614 = vmatpush1.msra.mxu0 0.0
    %1615 = vmatprep.mubr.f32.mxu0 0.0
    %v1616 = vand.u32 %v1135, 4294901760
    %1617 = vmatmul.mubr.f32.gmra.mrb[0].mxu0 %v1616
    %v1618 = vpop.f32.mrb[0].mxu0
    %v1619 = vadd.f32 %v1544, %v1618
    %v1620 = vpop.f32.mrb[0].mxu0
    %1621 = vdwg.mxu0
    %vm1622 = vcmask 74752
    %1623 = vst.msk [vmem:[#allocation2] sm:$0x3] %vm1622, %v1619
    // Predicated region
    $region38: #{tpu_custom_call.1} parent=1 // pred_check
      _
    $region39: #{tpu_custom_call.1} parent=1 // pred_check_branch
      %1625 = sbr.rel (0) target = $region41
    $region40: #{tpu_custom_call.1} parent=1 // pred_region
      %s1627 = ssub.s32 32, 32
      %1628 = vsyncadd [#allocation3], %s1627
      %s1630 = sshll.u32 [#allocation2], 4
      %s1631 = int_to_ptr.vmem [resolvable:$true] %s1630
      %1633 = dma.vmem_to_hbm [thread:$0]  %s1631, 32, %s9, [#allocation3]
    $region41: #{tpu_custom_call.1} parent=1 // pred_fallthru
      _
    // Predicated region
    $region42: #{tpu_custom_call.1} parent=1 // pred_check
      _
    $region43: #{tpu_custom_call.1} parent=1 // pred_check_branch
      %1635 = sbr.rel (0) target = $region45
    $region44: #{tpu_custom_call.1} parent=1 // pred_region
      %1636 = dma.done [#allocation3], 32
    $region45: #{tpu_custom_call.1} parent=1 // pred_fallthru
      _
    %1637 = vsyncpa [#allocation3], 1

</llo_original>
